<compile_context>
chip_gen: v5e
topology: v5e:2x2
jax: 0.10.0
libtpu: 0.0.40
codegen_flags: <defaults>
</compile_context>

<pallas_src>
import math
from functools import partial

import jax
import jax.numpy as jnp
from jax.experimental import pallas as pl
from jax.experimental.pallas import tpu as pltpu

EMB = 256
NUM_HEADS = 2
HEAD = EMB // NUM_HEADS  # 128


def _attn_kernel(q_ref, k_ref, mask_ref, w_ref, b_ref, o_ref, *, bb, s_q, s_k):
    # q_ref    : [bb*s_q, 256] f32   (batch folded into rows)
    # k_ref    : [bb*s_k, 256] f32
    # mask_ref : [bb, 1, s_k]  f32
    # w_ref    : [3, 256, 256] bf16  (Wq*scale, Wk, Wo), already [in, out]
    # b_ref    : [3, 1, 256]   f32   (bq*scale, bk, bo)
    # o_ref    : [bb*s_q, 256] f32

    # Cast activations to bf16 on-chip (free VPU cast; avoids a wrapper-side pass).
    q_bf = q_ref[...].astype(jnp.bfloat16)
    k_bf = k_ref[...].astype(jnp.bfloat16)

    # Full-width projections (f32 accumulation on the MXU).
    qp = (jnp.dot(q_bf, w_ref[0], preferred_element_type=jnp.float32)
          + b_ref[0]).astype(jnp.bfloat16)                       # [bb*s_q, 256]
    kp = (jnp.dot(k_bf, w_ref[1], preferred_element_type=jnp.float32)
          + b_ref[1]).astype(jnp.bfloat16)                       # [bb*s_k, 256]

    mask_add = (mask_ref[...] == 0.0).astype(jnp.float32)        # [bb, 1, s_k]

    # Per-(batch, head) scores + softmax (f32), then gather the probabilities
    # into one [bb*s_q, NUM_HEADS*s_k] bf16 tile: heads along lanes (128-aligned),
    # batches along sublanes.  This matches the torch permute+contiguous().view
    # "cat" layout, so a single K=256 matmul against Wo finishes the output.
    p_rows = []
    for b in range(bb):                                          # static tiny loops
        m_b = mask_add[b]                                        # [1, s_k]
        p_heads = []
        for h in range(NUM_HEADS):
            q_bh = qp[b * s_q:(b + 1) * s_q, h * HEAD:(h + 1) * HEAD]   # [s_q, 128]
            k_bh = kp[b * s_k:(b + 1) * s_k, h * HEAD:(h + 1) * HEAD]   # [s_k, 128]
            # literal torch.matmul(q, k): NO transpose on k (valid since s_k == 128)
            s = jnp.dot(q_bh, k_bh, preferred_element_type=jnp.float32)  # [s_q, s_k]
            s = s + m_b
            s = s - jnp.max(s, axis=-1, keepdims=True)
            e = jnp.exp(s)
            p = e * pl.reciprocal(jnp.sum(e, axis=-1, keepdims=True), approx=True)
            p_heads.append(p.astype(jnp.bfloat16))
        p_rows.append(jnp.concatenate(p_heads, axis=-1))          # [s_q, 2*s_k]
    p_cat = p_rows[0] if bb == 1 else jnp.concatenate(p_rows, axis=0)  # [bb*s_q, 256]

    # Single fused output projection: one K=256 matmul, one bias add, one
    # fully lane-dense store.
    out = jnp.dot(p_cat, w_ref[2], preferred_element_type=jnp.float32) + b_ref[2]
    o_ref[...] = out.astype(o_ref.dtype)


def pack_params(params):
    """One-time parameter packing (hoisted out of the forward path).

    Folds the 1/sqrt(256) activation scale into the query weight/bias, casts
    weights to bf16, and stacks everything so the kernel needs only two
    grid-invariant (resident) parameter DMAs.
    """
    wq, bq, wk, bk, wo, bo = params
    scale = 1.0 / math.sqrt(EMB)
    w_all = jnp.stack([wq * scale, wk, wo]).astype(jnp.bfloat16)            # [3,256,256]
    b_all = jnp.stack([bq * scale, bk, bo]).reshape(3, 1, EMB).astype(jnp.float32)
    return w_all, b_all


def _pick_bb(B):
    # Prefer >= 2 grid steps so multi-TC chips (v7x) can shard the 'parallel'
    # axis; otherwise fold up to 4 batches per step to amortize the ~0.35 us
    # per-step overhead on single-TC chips (v5e/v6e) and keep the MXU full.
    for bb in (4, 2, 1):
        if B % bb == 0 and B // bb >= 2:
            return bb
    return 1


@jax.jit
def model_forward(q, k, v, attention_mask, packed_params):
    # value projection is computed by the torch module but never used in the output
    del v
    w_all, b_all = packed_params
    B, S_q, _ = q.shape
    S_k = k.shape[1]
    assert S_k == HEAD, "torch.matmul(q, k) (no transpose) requires S_k == head_size == 128"

    BB = _pick_bb(B)
    n_blk = B // BB

    q2 = q.reshape(B * S_q, EMB)                    # stays f32; cast on-chip
    k2 = k.reshape(B * S_k, EMB)
    m3 = attention_mask.reshape(B, 1, S_k).astype(jnp.float32)

    kernel = partial(_attn_kernel, bb=BB, s_q=S_q, s_k=S_k)

    grid_spec = pltpu.PrefetchScalarGridSpec(
        num_scalar_prefetch=0,
        grid=(n_blk,),
        in_specs=[
            pl.BlockSpec((BB * S_q, EMB), lambda i: (i, 0)),      # q rows (f32)
            pl.BlockSpec((BB * S_k, EMB), lambda i: (i, 0)),      # k rows (f32)
            pl.BlockSpec((BB, 1, S_k), lambda i: (i, 0, 0)),      # mask
            pl.BlockSpec((3, EMB, EMB), lambda i: (0, 0, 0)),     # packed weights (resident)
            pl.BlockSpec((3, 1, EMB), lambda i: (0, 0, 0)),       # packed biases (resident)
        ],
        out_specs=pl.BlockSpec((BB * S_q, EMB), lambda i: (i, 0)),
    )

    out2 = pl.pallas_call(
        kernel,
        out_shape=jax.ShapeDtypeStruct((B * S_q, EMB), jnp.float32),
        grid_spec=grid_spec,
        compiler_params=pltpu.CompilerParams(
            dimension_semantics=("parallel",)),
    )(q2, k2, m3, w_all, b_all)
    return out2.reshape(B, S_q, EMB)


def reference_forward(q, k, v, attention_mask, params):
    """Pure-JAX f32 reference implementing the same (repaired) semantics."""
    del v
    wq, bq, wk, bk, wo, bo = params
    B, S_q, _ = q.shape
    qp = (q @ wq + bq) / math.sqrt(EMB)
    kp = k @ wk + bk
    qh = qp.reshape(B, S_q, NUM_HEADS, HEAD).transpose(0, 2, 1, 3)   # [B,H,S_q,128]
    kh = kp.reshape(B, HEAD, NUM_HEADS, HEAD).transpose(0, 2, 1, 3)  # [B,H,128,128]
    scores = jnp.einsum('bhqd,bhdk->bhqk', qh, kh)                   # literal matmul(q,k)
    mask_add = (attention_mask == 0.0).astype(jnp.float32)[:, None, None, :]
    scores = scores + mask_add
    p = jax.nn.softmax(scores, axis=-1)
    cat = p.transpose(0, 2, 1, 3).reshape(B, S_q, EMB)
    return cat @ wo + bo


def init_params(key):
    ks = jax.random.split(key, 6)
    scale = 1.0 / math.sqrt(EMB)
    wq = jax.random.normal(ks[0], (EMB, EMB), jnp.float32) * scale  # already [in, out]
    bq = jax.random.normal(ks[1], (1, EMB), jnp.float32) * scale
    wk = jax.random.normal(ks[2], (EMB, EMB), jnp.float32) * scale
    bk = jax.random.normal(ks[3], (1, EMB), jnp.float32) * scale
    wo = jax.random.normal(ks[4], (EMB, EMB), jnp.float32) * scale
    bo = jax.random.normal(ks[5], (1, EMB), jnp.float32) * scale
    return (wq, bq, wk, bk, wo, bo)


if __name__ == "__main__":
    key = jax.random.PRNGKey(0)
    kq, kk, kv, km, kparam = jax.random.split(key, 5)

    B, S_q, S_k = 2, 128, HEAD  # S_k must equal 128 (== head size) for this module
    q = jax.random.normal(kq, (B, S_q, EMB), jnp.float32)
    k = jax.random.normal(kk, (B, S_k, EMB), jnp.float32)
    v = jax.random.normal(kv, (B, S_k, EMB), jnp.float32)
    attention_mask = jax.random.bernoulli(km, 0.8, (B, S_k)).astype(jnp.float32)

    params = init_params(kparam)
    # One-time packing, done once outside the forward path (hoisted per review).
    packed = jax.block_until_ready(pack_params(params))

    out = jax.block_until_ready(model_forward(q, k, v, attention_mask, packed))
    ref = reference_forward(q, k, v, attention_mask, params)

    assert out.shape == (B, S_q, EMB)
    # kernel runs matmuls in bf16 (f32 accumulation) -> compare with bf16-level tolerance
    assert jnp.allclose(out, ref, atol=2e-2, rtol=2e-2), "mismatch vs reference"

    print("KERNEL_OK")
</pallas_src>

<mosaic_0001>
module attributes {stable_mosaic.version = 11 : i64} {
  func.func @_attn_kernel(%arg0: i32, %arg1: memref<128x256xf32, #tpu.memory_space<vmem>>, %arg2: memref<128x256xf32, #tpu.memory_space<vmem>>, %arg3: memref<1x1x128xf32, #tpu.memory_space<vmem>>, %arg4: memref<3x256x256xbf16, #tpu.memory_space<vmem>>, %arg5: memref<3x1x256xf32, #tpu.memory_space<vmem>>, %arg6: memref<128x256xf32, #tpu.memory_space<vmem>>) attributes {dimension_semantics = [#tpu.dimension_semantics<parallel>], iteration_bounds = array<i64: 2>, scalar_prefetch = 0 : i64, scratch_operands = 0 : i64, tpu.core_type = #tpu.core_type<tc>, window_params = [{transform_indices = @transform_0, window_bounds = array<i64: 128, 256>}, {transform_indices = @transform_1, window_bounds = array<i64: 128, 256>}, {transform_indices = @transform_2, window_bounds = array<i64: 1, 1, 128>}, {pipeline_mode = #tpu.pipeline_mode<synchronous>, transform_indices = @transform_3, window_bounds = array<i64: 3, 256, 256>}, {pipeline_mode = #tpu.pipeline_mode<synchronous>, transform_indices = @transform_4, window_bounds = array<i64: 3, 1, 256>}, {transform_indices = @transform_5, window_bounds = array<i64: 128, 256>}]} {
    %c0 = arith.constant 0 : index
    %c0_0 = arith.constant 0 : index
    %0 = vector.load %arg1[%c0, %c0_0] : memref<128x256xf32, #tpu.memory_space<vmem>>, vector<128x256xf32>
    %1 = arith.truncf %0 : vector<128x256xf32> to vector<128x256xbf16>
    %c0_1 = arith.constant 0 : index
    %c0_2 = arith.constant 0 : index
    %2 = vector.load %arg2[%c0_1, %c0_2] : memref<128x256xf32, #tpu.memory_space<vmem>>, vector<128x256xf32>
    %3 = arith.truncf %2 : vector<128x256xf32> to vector<128x256xbf16>
    %c0_3 = arith.constant 0 : index
    %c0_4 = arith.constant 0 : index
    %c0_5 = arith.constant 0 : index
    %4 = vector.load %arg4[%c0_3, %c0_4, %c0_5] : memref<3x256x256xbf16, #tpu.memory_space<vmem>>, vector<1x256x256xbf16>
    %5 = vector.shape_cast %4 : vector<1x256x256xbf16> to vector<256x256xbf16>
    %cst = arith.constant dense<0.000000e+00> : vector<128x256xf32>
    %6 = tpu.matmul %1, %5, %cst {dimension_numbers = #tpu.dot_dimension_numbers<[1], [0], [0], [1], [0, 0, 1, 1], [], []>} : vector<128x256xbf16>, vector<256x256xbf16>, vector<128x256xf32> -> vector<128x256xf32>
    %c0_6 = arith.constant 0 : index
    %c0_7 = arith.constant 0 : index
    %c0_8 = arith.constant 0 : index
    %7 = vector.load %arg5[%c0_6, %c0_7, %c0_8] : memref<3x1x256xf32, #tpu.memory_space<vmem>>, vector<1x1x256xf32>
    %8 = vector.shape_cast %7 : vector<1x1x256xf32> to vector<1x256xf32>
    %9 = vector.broadcast %8 : vector<1x256xf32> to vector<128x256xf32>
    %10 = arith.addf %6, %9 : vector<128x256xf32>
    %11 = arith.truncf %10 : vector<128x256xf32> to vector<128x256xbf16>
    %c1 = arith.constant 1 : index
    %c0_9 = arith.constant 0 : index
    %c0_10 = arith.constant 0 : index
    %12 = vector.load %arg4[%c1, %c0_9, %c0_10] : memref<3x256x256xbf16, #tpu.memory_space<vmem>>, vector<1x256x256xbf16>
    %13 = vector.shape_cast %12 : vector<1x256x256xbf16> to vector<256x256xbf16>
    %cst_11 = arith.constant dense<0.000000e+00> : vector<128x256xf32>
    %14 = tpu.matmul %3, %13, %cst_11 {dimension_numbers = #tpu.dot_dimension_numbers<[1], [0], [0], [1], [0, 0, 1, 1], [], []>} : vector<128x256xbf16>, vector<256x256xbf16>, vector<128x256xf32> -> vector<128x256xf32>
    %c1_12 = arith.constant 1 : index
    %c0_13 = arith.constant 0 : index
    %c0_14 = arith.constant 0 : index
    %15 = vector.load %arg5[%c1_12, %c0_13, %c0_14] : memref<3x1x256xf32, #tpu.memory_space<vmem>>, vector<1x1x256xf32>
    %16 = vector.shape_cast %15 : vector<1x1x256xf32> to vector<1x256xf32>
    %17 = vector.broadcast %16 : vector<1x256xf32> to vector<128x256xf32>
    %18 = arith.addf %14, %17 : vector<128x256xf32>
    %19 = arith.truncf %18 : vector<128x256xf32> to vector<128x256xbf16>
    %c0_15 = arith.constant 0 : index
    %c0_16 = arith.constant 0 : index
    %c0_17 = arith.constant 0 : index
    %20 = vector.load %arg3[%c0_15, %c0_16, %c0_17] : memref<1x1x128xf32, #tpu.memory_space<vmem>>, vector<1x1x128xf32>
    %cst_18 = arith.constant 0.000000e+00 : f32
    %21 = vector.broadcast %cst_18 : f32 to vector<1x1x128xf32>
    %22 = arith.cmpf oeq, %20, %21 : vector<1x1x128xf32>
    %23 = arith.extui %22 : vector<1x1x128xi1> to vector<1x1x128xi32>
    %24 = arith.sitofp %23 : vector<1x1x128xi32> to vector<1x1x128xf32>
    %25 = vector.shape_cast %24 : vector<1x1x128xf32> to vector<1x128xf32>
    %26 = vector.extract_strided_slice %11 {offsets = [0, 0], sizes = [128, 128], strides = [1, 1]} : vector<128x256xbf16> to vector<128x128xbf16>
    %27 = vector.extract_strided_slice %19 {offsets = [0, 0], sizes = [128, 128], strides = [1, 1]} : vector<128x256xbf16> to vector<128x128xbf16>
    %cst_19 = arith.constant dense<0.000000e+00> : vector<128x128xf32>
    %28 = tpu.matmul %26, %27, %cst_19 {dimension_numbers = #tpu.dot_dimension_numbers<[1], [0], [0], [1], [0, 0, 1, 1], [], []>} : vector<128x128xbf16>, vector<128x128xbf16>, vector<128x128xf32> -> vector<128x128xf32>
    %29 = vector.broadcast %25 : vector<1x128xf32> to vector<128x128xf32>
    %30 = arith.addf %28, %29 : vector<128x128xf32>
    %cst_20 = arith.constant dense<0xFF800000> : vector<128xf32>
    %31 = vector.multi_reduction <maximumf>, %30, %cst_20 [1] : vector<128x128xf32> to vector<128xf32>
    %32 = vector.shape_cast %31 : vector<128xf32> to vector<128x1xf32>
    %33 = vector.broadcast %32 : vector<128x1xf32> to vector<128x128xf32>
    %34 = arith.subf %30, %33 : vector<128x128xf32>
    %35 = math.exp %34 : vector<128x128xf32>
    %cst_21 = arith.constant dense<0.000000e+00> : vector<128xf32>
    %36 = vector.multi_reduction <add>, %35, %cst_21 [1] : vector<128x128xf32> to vector<128xf32>
    %37 = vector.shape_cast %36 : vector<128xf32> to vector<128x1xf32>
    %38 = tpu.reciprocal %37 {approx = true} : vector<128x1xf32> -> vector<128x1xf32>
    %39 = vector.broadcast %38 : vector<128x1xf32> to vector<128x128xf32>
    %40 = arith.mulf %35, %39 : vector<128x128xf32>
    %41 = arith.truncf %40 : vector<128x128xf32> to vector<128x128xbf16>
    %42 = vector.extract_strided_slice %11 {offsets = [0, 128], sizes = [128, 128], strides = [1, 1]} : vector<128x256xbf16> to vector<128x128xbf16>
    %43 = vector.extract_strided_slice %19 {offsets = [0, 128], sizes = [128, 128], strides = [1, 1]} : vector<128x256xbf16> to vector<128x128xbf16>
    %cst_22 = arith.constant dense<0.000000e+00> : vector<128x128xf32>
    %44 = tpu.matmul %42, %43, %cst_22 {dimension_numbers = #tpu.dot_dimension_numbers<[1], [0], [0], [1], [0, 0, 1, 1], [], []>} : vector<128x128xbf16>, vector<128x128xbf16>, vector<128x128xf32> -> vector<128x128xf32>
    %45 = vector.broadcast %25 : vector<1x128xf32> to vector<128x128xf32>
    %46 = arith.addf %44, %45 : vector<128x128xf32>
    %cst_23 = arith.constant dense<0xFF800000> : vector<128xf32>
    %47 = vector.multi_reduction <maximumf>, %46, %cst_23 [1] : vector<128x128xf32> to vector<128xf32>
    %48 = vector.shape_cast %47 : vector<128xf32> to vector<128x1xf32>
    %49 = vector.broadcast %48 : vector<128x1xf32> to vector<128x128xf32>
    %50 = arith.subf %46, %49 : vector<128x128xf32>
    %51 = math.exp %50 : vector<128x128xf32>
    %cst_24 = arith.constant dense<0.000000e+00> : vector<128xf32>
    %52 = vector.multi_reduction <add>, %51, %cst_24 [1] : vector<128x128xf32> to vector<128xf32>
    %53 = vector.shape_cast %52 : vector<128xf32> to vector<128x1xf32>
    %54 = tpu.reciprocal %53 {approx = true} : vector<128x1xf32> -> vector<128x1xf32>
    %55 = vector.broadcast %54 : vector<128x1xf32> to vector<128x128xf32>
    %56 = arith.mulf %51, %55 : vector<128x128xf32>
    %57 = arith.truncf %56 : vector<128x128xf32> to vector<128x128xbf16>
    %58 = tpu.concatenate %41, %57 in 1 : vector<128x128xbf16>, vector<128x128xbf16> -> vector<128x256xbf16>
    %c2 = arith.constant 2 : index
    %c0_25 = arith.constant 0 : index
    %c0_26 = arith.constant 0 : index
    %59 = vector.load %arg4[%c2, %c0_25, %c0_26] : memref<3x256x256xbf16, #tpu.memory_space<vmem>>, vector<1x256x256xbf16>
    %60 = vector.shape_cast %59 : vector<1x256x256xbf16> to vector<256x256xbf16>
    %cst_27 = arith.constant dense<0.000000e+00> : vector<128x256xf32>
    %61 = tpu.matmul %58, %60, %cst_27 {dimension_numbers = #tpu.dot_dimension_numbers<[1], [0], [0], [1], [0, 0, 1, 1], [], []>} : vector<128x256xbf16>, vector<256x256xbf16>, vector<128x256xf32> -> vector<128x256xf32>
    %c2_28 = arith.constant 2 : index
    %c0_29 = arith.constant 0 : index
    %c0_30 = arith.constant 0 : index
    %62 = vector.load %arg5[%c2_28, %c0_29, %c0_30] : memref<3x1x256xf32, #tpu.memory_space<vmem>>, vector<1x1x256xf32>
    %63 = vector.shape_cast %62 : vector<1x1x256xf32> to vector<1x256xf32>
    %64 = vector.broadcast %63 : vector<1x256xf32> to vector<128x256xf32>
    %65 = arith.addf %61, %64 : vector<128x256xf32>
    %c0_31 = arith.constant 0 : index
    %c0_32 = arith.constant 0 : index
    %66 = vector.load %arg6[%c0_31, %c0_32] : memref<128x256xf32, #tpu.memory_space<vmem>>, vector<128x256xf32>
    tpu.vector_store %arg6[%c0_31, %c0_32], %65 {strides = array<i32>} : memref<128x256xf32, #tpu.memory_space<vmem>>, vector<128x256xf32>,
    return
  }
  func.func @transform_0(%arg0: i32) -> (i32, i32) {
    %c0_i32 = arith.constant 0 : i32
    %c0_i32_0 = arith.constant 0 : i32
    return %arg0, %c0_i32 : i32, i32
  }
  func.func @transform_1(%arg0: i32) -> (i32, i32) {
    %c0_i32 = arith.constant 0 : i32
    %c0_i32_0 = arith.constant 0 : i32
    return %arg0, %c0_i32 : i32, i32
  }
  func.func @transform_2(%arg0: i32) -> (i32, i32, i32) {
    %c0_i32 = arith.constant 0 : i32
    %c0_i32_0 = arith.constant 0 : i32
    %c0_i32_1 = arith.constant 0 : i32
    return %arg0, %c0_i32, %c0_i32_0 : i32, i32, i32
  }
  func.func @transform_3(%arg0: i32) -> (i32, i32, i32) {
    %c0_i32 = arith.constant 0 : i32
    %c0_i32_0 = arith.constant 0 : i32
    %c0_i32_1 = arith.constant 0 : i32
    %c0_i32_2 = arith.constant 0 : i32
    return %c0_i32, %c0_i32_0, %c0_i32_1 : i32, i32, i32
  }
  func.func @transform_4(%arg0: i32) -> (i32, i32, i32) {
    %c0_i32 = arith.constant 0 : i32
    %c0_i32_0 = arith.constant 0 : i32
    %c0_i32_1 = arith.constant 0 : i32
    %c0_i32_2 = arith.constant 0 : i32
    return %c0_i32, %c0_i32_0, %c0_i32_1 : i32, i32, i32
  }
  func.func @transform_5(%arg0: i32) -> (i32, i32) {
    %c0_i32 = arith.constant 0 : i32
    %c0_i32_0 = arith.constant 0 : i32
    return %arg0, %c0_i32 : i32, i32
  }
}

</mosaic_0001>

<llo_original>
// kernel: model_forward.1
$region0: #{model_forward.1}
  #allocation0 [shape = 'u32[]', space=smem, size = 0x4, offset = 0x4, fixed_abs, tag = 'smem constant byte address 0x4 - core index']
  #allocation1 [shape = 'u32[72,128]{1,0:T(1,128)}', space=vmem, size = 0x9000, scoped, tag = 'internal scratch']
  %s0 = inlined_call_operand.hbm [shape: f32[256,256], index: 0, kind: input, shape index: {}]
  %s1 = inlined_call_operand.hbm [shape: f32[256,256], index: 1, kind: input, shape index: {}]
  %s2 = inlined_call_operand.hbm [shape: f32[2,1,128], index: 2, kind: input, shape index: {}]
  %s3 = inlined_call_operand.hbm [shape: bf16[3,256,256], index: 3, kind: input, shape index: {}]
  %s4 = inlined_call_operand.vmem [shape: f32[3,1,256], index: 4, kind: input, shape index: {}]
  %s5 = inlined_call_operand.hbm [shape: f32[256,256], index: 5, kind: output, shape index: {}]
  %s6 = sld [smem:[#allocation0]]
  $region69: #{model_forward.1} parent=0
    _
  %s8 = ssub.s32 1, %s6
  %s9 = scalar_select 0, %s8, %s6
  $region1: #{model_forward.1} parent=0
    #allocation2 [shape = 'u8[262144]{0}', space=vmem, size = 0x40000, scoped, tag = 'input window, operand 0']
    #allocation3 [shape = 's32[2]{0}', space=sflag, size = 0x8, scoped, tag = 'scoped memory for model_forward.1']
    #allocation4 [shape = 's32[2]{0}', space=sflag, size = 0x8, scoped, tag = 'scoped memory for model_forward.1']
    #allocation5 [shape = 'u8[262144]{0}', space=vmem, size = 0x40000, scoped, tag = 'input window, operand 1']
    #allocation6 [shape = 's32[2]{0}', space=sflag, size = 0x8, scoped, tag = 'scoped memory for model_forward.1']
    #allocation7 [shape = 'u8[1024]{0}', space=vmem, size = 0x400, scoped, tag = 'input window, operand 2']
    #allocation8 [shape = 'u8[393216]{0}', space=vmem, size = 0x60000, scoped, tag = 'input window, operand 3, single buffered']
    #allocation9 [shape = 's32[1]{0}', space=sflag, size = 0x4, scoped, tag = 'scoped memory for model_forward.1']
    #allocation10 [shape = 'u8[262144]{0}', space=vmem, size = 0x40000, scoped, tag = 'output window, operand 0']
    %10 = vsyncpa [#allocation3], 0
    %s11 = scalar_lea.sflag [#allocation3], 1
    %12 = vsyncpa %s11, 0
    %13 = vsyncpa [#allocation6], 0
    %s14 = scalar_lea.sflag [#allocation6], 1
    %15 = vsyncpa %s14, 0
    %16 = vsyncpa [#allocation9], 0
    %17 = vsyncpa [#allocation4], 0
    %s18 = scalar_lea.sflag [#allocation4], 1
    %19 = vsyncpa %s18, 0
    loop: start=0, step=1, limit=4
    $region2: #{model_forward.1} parent=1 // loop_pre_header
      _
    $region3: #{model_forward.1} parent=1 // loop_header
      %s21 = sphi 0, %s25
      %p22 = scmp.ge.s32.totalorder %s21, 4
      %s31 = sphi 0, %s33
      %s34 = sphi 0, %s31
      %s35 = sphi 0, %s34
      %s51 = sphi 0, %s35
      %s57 = sphi 0, %s59
      %s60 = sphi 0, %s57
      %s61 = sphi 0, %s60
      %s77 = sphi 0, %s61
      %s83 = sphi 0, %s85
      %s86 = sphi 0, %s83
      %s87 = sphi 0, %s86
      %s103 = sphi 0, %s87
      %s107 = sphi 0, %s107
      %s109 = sphi 0, %s107
      %s110 = sphi 0, %s109
      %s124 = sphi 0, %s110
      %s128 = sphi 0, %s128
      %s130 = sphi 0, %s128
      %s131 = sphi 0, %s130
      %s145 = sphi 0, %s131
      %s151 = sphi 0, %s153
      %s154 = sphi 0, %s151
      %s155 = sphi 0, %s154
      %s171 = sphi 0, %s155
    $region4: #{model_forward.1} parent=1 // loop_header_branch
      %24 = sbr.rel (%p22) target = $region8
    $region5: #{model_forward.1} parent=1 // loop_body
      %s26 = ssub.s32 %s21, 1
      %s27 = ssub.s32 %s21, 2
      %s28 = sadd.s32 %s21, 1
      %s29 = ssub.s32 %s21, %s28
      %p30 = scmp.eq.s32.totalorder %s29, 0
      %s32 = sadd.s32 %s31, 1
      %s33 = scalar_select %p30, %s31, %s32
      %p36 = pneg %p30
      %p37 = scmp.eq.s32.totalorder %s21, 1
      %p38 = por %p36, %p37
      %p39 = scmp.ne.s32.totalorder %s31, %s34
      %p40 = scmp.eq.s32.totalorder %s21, 0
      %p41 = por %p39, %p40
      %p42 = scmp.ne.s32.totalorder %s31, %s34
      %p43 = scmp.eq.s32.totalorder %s26, 1
      %p44 = por %p42, %p43
      %p45 = scmp.ne.s32.totalorder %s34, %s35
      %p46 = scmp.eq.s32.totalorder %s26, 0
      %p47 = por %p45, %p46
      %p48 = scmp.ne.s32.totalorder %s34, %s35
      %p49 = scmp.eq.s32.totalorder %s27, 1
      %p50 = por %p48, %p49
      %p52 = scmp.ne.s32.totalorder %s35, %s51
      %p53 = scmp.eq.s32.totalorder %s27, 0
      %p54 = por %p52, %p53
      %s55 = ssub.s32 %s21, %s28
      %p56 = scmp.eq.s32.totalorder %s55, 0
      %s58 = sadd.s32 %s57, 1
      %s59 = scalar_select %p56, %s57, %s58
      %p62 = pneg %p56
      %p63 = scmp.eq.s32.totalorder %s21, 1
      %p64 = por %p62, %p63
      %p65 = scmp.ne.s32.totalorder %s57, %s60
      %p66 = scmp.eq.s32.totalorder %s21, 0
      %p67 = por %p65, %p66
      %p68 = scmp.ne.s32.totalorder %s57, %s60
      %p69 = scmp.eq.s32.totalorder %s26, 1
      %p70 = por %p68, %p69
      %p71 = scmp.ne.s32.totalorder %s60, %s61
      %p72 = scmp.eq.s32.totalorder %s26, 0
      %p73 = por %p71, %p72
      %p74 = scmp.ne.s32.totalorder %s60, %s61
      %p75 = scmp.eq.s32.totalorder %s27, 1
      %p76 = por %p74, %p75
      %p78 = scmp.ne.s32.totalorder %s61, %s77
      %p79 = scmp.eq.s32.totalorder %s27, 0
      %p80 = por %p78, %p79
      %s81 = ssub.s32 %s21, %s28
      %p82 = scmp.eq.s32.totalorder %s81, 0
      %s84 = sadd.s32 %s83, 1
      %s85 = scalar_select %p82, %s83, %s84
      %p88 = pneg %p82
      %p89 = scmp.eq.s32.totalorder %s21, 1
      %p90 = por %p88, %p89
      %p91 = scmp.ne.s32.totalorder %s83, %s86
      %p92 = scmp.eq.s32.totalorder %s21, 0
      %p93 = por %p91, %p92
      %p94 = scmp.ne.s32.totalorder %s83, %s86
      %p95 = scmp.eq.s32.totalorder %s26, 1
      %p96 = por %p94, %p95
      %p97 = scmp.ne.s32.totalorder %s86, %s87
      %p98 = scmp.eq.s32.totalorder %s26, 0
      %p99 = por %p97, %p98
      %p100 = scmp.ne.s32.totalorder %s86, %s87
      %p101 = scmp.eq.s32.totalorder %s27, 1
      %p102 = por %p100, %p101
      %p104 = scmp.ne.s32.totalorder %s87, %s103
      %p105 = scmp.eq.s32.totalorder %s27, 0
      %p106 = por %p104, %p105
      %s108 = sadd.s32 %s107, 1
      %p111 = scmp.eq.s32.totalorder %s21, 1
      %p112 = scmp.ne.s32.totalorder %s107, %s109
      %p113 = scmp.eq.s32.totalorder %s21, 0
      %p114 = por %p112, %p113
      %p115 = scmp.ne.s32.totalorder %s107, %s109
      %p116 = scmp.eq.s32.totalorder %s26, 1
      %p117 = por %p115, %p116
      %p118 = scmp.ne.s32.totalorder %s109, %s110
      %p119 = scmp.eq.s32.totalorder %s26, 0
      %p120 = por %p118, %p119
      %p121 = scmp.ne.s32.totalorder %s109, %s110
      %p122 = scmp.eq.s32.totalorder %s27, 1
      %p123 = por %p121, %p122
      %p125 = scmp.ne.s32.totalorder %s110, %s124
      %p126 = scmp.eq.s32.totalorder %s27, 0
      %p127 = por %p125, %p126
      %s129 = sadd.s32 %s128, 1
      %p132 = scmp.eq.s32.totalorder %s21, 1
      %p133 = scmp.ne.s32.totalorder %s128, %s130
      %p134 = scmp.eq.s32.totalorder %s21, 0
      %p135 = por %p133, %p134
      %p136 = scmp.ne.s32.totalorder %s128, %s130
      %p137 = scmp.eq.s32.totalorder %s26, 1
      %p138 = por %p136, %p137
      %p139 = scmp.ne.s32.totalorder %s130, %s131
      %p140 = scmp.eq.s32.totalorder %s26, 0
      %p141 = por %p139, %p140
      %p142 = scmp.ne.s32.totalorder %s130, %s131
      %p143 = scmp.eq.s32.totalorder %s27, 1
      %p144 = por %p142, %p143
      %p146 = scmp.ne.s32.totalorder %s131, %s145
      %p147 = scmp.eq.s32.totalorder %s27, 0
      %p148 = por %p146, %p147
      %s149 = ssub.s32 %s21, %s28
      %p150 = scmp.eq.s32.totalorder %s149, 0
      %s152 = sadd.s32 %s151, 1
      %s153 = scalar_select %p150, %s151, %s152
      %p156 = pneg %p150
      %p157 = scmp.eq.s32.totalorder %s21, 1
      %p158 = por %p156, %p157
      %p159 = scmp.ne.s32.totalorder %s151, %s154
      %p160 = scmp.eq.s32.totalorder %s21, 0
      %p161 = por %p159, %p160
      %p162 = scmp.ne.s32.totalorder %s151, %s154
      %p163 = scmp.eq.s32.totalorder %s26, 1
      %p164 = por %p162, %p163
      %p165 = scmp.ne.s32.totalorder %s154, %s155
      %p166 = scmp.eq.s32.totalorder %s26, 0
      %p167 = por %p165, %p166
      %p168 = scmp.ne.s32.totalorder %s154, %s155
      %p169 = scmp.eq.s32.totalorder %s27, 1
      %p170 = por %p168, %p169
      %p172 = scmp.ne.s32.totalorder %s155, %s171
      %p173 = scmp.eq.s32.totalorder %s27, 0
      %p174 = por %p172, %p173
      %p175 = scmp.le.s32.totalorder 1, %s21
      %p176 = scmp.lt.s32.totalorder %s21, 3
      %p177 = pnand %p175, %p176
      %p178 = pneg %p177
      // Predicated region
      $region9: #{model_forward.1} parent=5 // pred_check
        _
      $region10: #{model_forward.1} parent=5 // pred_check_branch
        %180 = sbr.rel (%p177) target = $region12
      $region11: #{model_forward.1} parent=5 // pred_region
        %s181 = ssub.s32 %s21, 1
        // Predicated region
        $region13: #{model_forward.1} parent=11 // pred_check
          %p182 = pneg %p120
        $region14: #{model_forward.1} parent=11 // pred_check_branch
          %184 = sbr.rel (%p182) target = $region16
        $region15: #{model_forward.1} parent=11 // pred_region
          %186 = vsyncadd [#allocation9], 0
          %s187 = sshll.u32 %s3, 4
          %s188 = int_to_ptr.hbm [resolvable:$true] %s187
          %s189 = sshll.u32 [#allocation8], 4
          %s190 = int_to_ptr.vmem [resolvable:$true] %s189
          %195 = dma.hbm_to_vmem [thread:$0]  %s188, 12288, %s190, [#allocation9], 128, 128, 8
        $region16: #{model_forward.1} parent=11 // pred_fallthru
          _
        // Predicated region
        $region17: #{model_forward.1} parent=11 // pred_check
          %p196 = pneg %p141
        $region18: #{model_forward.1} parent=11 // pred_check_branch
          %198 = sbr.rel (%p196) target = $region20
        $region19: #{model_forward.1} parent=11 // pred_region
          _
        $region20: #{model_forward.1} parent=11 // pred_fallthru
          _
      $region12: #{model_forward.1} parent=5 // pred_fallthru
        _
      %p199 = scmp.lt.s32.totalorder %s21, 2
      // Predicated region
      $region21: #{model_forward.1} parent=5 // pred_check
        %p200 = pneg %p199
      $region22: #{model_forward.1} parent=5 // pred_check_branch
        %202 = sbr.rel (%p200) target = $region24
      $region23: #{model_forward.1} parent=5 // pred_region
        // Predicated region
        $region25: #{model_forward.1} parent=23 // pred_check
          %p203 = pneg %p41
        $region26: #{model_forward.1} parent=23 // pred_check_branch
          %205 = sbr.rel (%p203) target = $region28
        $region27: #{model_forward.1} parent=23 // pred_region
          %s206 = sand.u32 %s31, 1
          %s207 = scalar_lea.sflag [#allocation3], %s206
          %s208 = sand.u32 %s31, 1
          %s209 = smul.addr %s208, 256
          %s210 = scalar_lea.vmem [#allocation2], %s209
          %s211 = smul.u32 16, %s21
          %213 = vsyncadd %s207, 0
          %s214 = smul.addr %s211, 2
          %s215 = smul.addr %s214, 8
          %s216 = scalar_lea.hbm %s0, %s215
          %s217 = sshll.u32 %s216, 4
          %s218 = int_to_ptr.hbm [resolvable:$true] %s217
          %s219 = sshll.u32 %s210, 4
          %s220 = int_to_ptr.vmem [resolvable:$true] %s219
          %225 = dma.hbm_to_vmem [thread:$0]  %s218, 4096, %s220, %s207, 256, 256, 16
        $region28: #{model_forward.1} parent=23 // pred_fallthru
          _
        // Predicated region
        $region29: #{model_forward.1} parent=23 // pred_check
          %p226 = pneg %p67
        $region30: #{model_forward.1} parent=23 // pred_check_branch
          %228 = sbr.rel (%p226) target = $region32
        $region31: #{model_forward.1} parent=23 // pred_region
          %s229 = sand.u32 %s21, 1
          %s230 = scalar_lea.sflag [#allocation6], %s229
          %s231 = sand.u32 %s57, 1
          %s232 = smul.addr %s231, 256
          %s233 = scalar_lea.vmem [#allocation5], %s232
          %s234 = smul.u32 16, %s21
          %236 = vsyncadd %s230, 0
          %s237 = smul.addr %s234, 2
          %s238 = smul.addr %s237, 8
          %s239 = scalar_lea.hbm %s1, %s238
          %s240 = sshll.u32 %s239, 4
          %s241 = int_to_ptr.hbm [resolvable:$true] %s240
          %s242 = sshll.u32 %s233, 4
          %s243 = int_to_ptr.vmem [resolvable:$true] %s242
          %248 = dma.hbm_to_vmem [thread:$0]  %s241, 4096, %s243, %s230, 256, 256, 16
        $region32: #{model_forward.1} parent=23 // pred_fallthru
          _
        // Predicated region
        $region33: #{model_forward.1} parent=23 // pred_check
          %p249 = pneg %p93
        $region34: #{model_forward.1} parent=23 // pred_check_branch
          %251 = sbr.rel (%p249) target = $region36
        $region35: #{model_forward.1} parent=23 // pred_region
          %s252 = sand.u32 %s21, 1
          %s253 = scalar_lea.sflag [#allocation6], %s252
          %s254 = sand.u32 %s83, 1
          %s255 = scalar_lea.vmem [#allocation7], %s254
          %257 = vsyncadd %s253, 0
          %s258 = scalar_lea.hbm %s2, %s21
          %s260 = sshll.u32 %s258, 4
          %s261 = int_to_ptr.hbm [resolvable:$true] %s260
          %s262 = sshll.u32 %s255, 4
          %s263 = int_to_ptr.vmem [resolvable:$true] %s262
          %265 = dma.hbm_to_vmem [thread:$0]  %s261, 16, %s263, %s253
        $region36: #{model_forward.1} parent=23 // pred_fallthru
          _
      $region24: #{model_forward.1} parent=5 // pred_fallthru
        _
      %p266 = scmp.le.s32.totalorder 1, %s21
      %p267 = scmp.lt.s32.totalorder %s21, 3
      %p268 = pnand %p266, %p267
      %p269 = pneg %p268
      // Predicated region
      $region37: #{model_forward.1} parent=5 // pred_check
        _
      $region38: #{model_forward.1} parent=5 // pred_check_branch
        %271 = sbr.rel (%p268) target = $region40
      $region39: #{model_forward.1} parent=5 // pred_region
        %s272 = ssub.s32 %s21, 1
        %s273 = sand.u32 %s34, 1
        %s274 = scalar_lea.sflag [#allocation3], %s273
        %s275 = sand.u32 %s34, 1
        %s276 = smul.addr %s275, 256
        %s277 = scalar_lea.vmem [#allocation2], %s276
        // Predicated region
        $region41: #{model_forward.1} parent=39 // pred_check
          %p278 = pneg %p47
        $region42: #{model_forward.1} parent=39 // pred_check_branch
          %280 = sbr.rel (%p278) target = $region44
        $region43: #{model_forward.1} parent=39 // pred_region
          %282 = dma.done %s274, 4096
        $region44: #{model_forward.1} parent=39 // pred_fallthru
          _
        %s283 = sand.u32 %s26, 1
        %s284 = scalar_lea.sflag [#allocation6], %s283
        %s285 = sand.u32 %s60, 1
        %s286 = smul.addr %s285, 256
        %s287 = scalar_lea.vmem [#allocation5], %s286
        // Predicated region
        $region45: #{model_forward.1} parent=39 // pred_check
          %p288 = pneg %p73
        $region46: #{model_forward.1} parent=39 // pred_check_branch
          %290 = sbr.rel (%p288) target = $region48
        $region47: #{model_forward.1} parent=39 // pred_region
          %292 = dma.done %s284, 4096
        $region48: #{model_forward.1} parent=39 // pred_fallthru
          _
        %s293 = sand.u32 %s26, 1
        %s294 = scalar_lea.sflag [#allocation6], %s293
        %s295 = sand.u32 %s86, 1
        %s296 = scalar_lea.vmem [#allocation7], %s295
        // Predicated region
        $region49: #{model_forward.1} parent=39 // pred_check
          %p297 = pneg %p99
        $region50: #{model_forward.1} parent=39 // pred_check_branch
          %299 = sbr.rel (%p297) target = $region52
        $region51: #{model_forward.1} parent=39 // pred_region
          %301 = dma.done %s294, 16
        $region52: #{model_forward.1} parent=39 // pred_fallthru
          _
        // Predicated region
        $region53: #{model_forward.1} parent=39 // pred_check
          %p302 = pneg %p120
        $region54: #{model_forward.1} parent=39 // pred_check_branch
          %304 = sbr.rel (%p302) target = $region56
        $region55: #{model_forward.1} parent=39 // pred_region
          %306 = dma.done [#allocation9], 12288
        $region56: #{model_forward.1} parent=39 // pred_fallthru
          _
        %s307 = sand.u32 %s34, 1
        %s308 = scalar_lea.sflag [#allocation3], %s307
        %s309 = sand.u32 %s34, 1
        %s310 = smul.addr %s309, 256
        %s311 = scalar_lea.vmem [#allocation2], %s310
        %p312 = pneg %p47
        %p313 = pneg %p44
        %s314 = sand.u32 %s26, 1
        %s315 = scalar_lea.sflag [#allocation6], %s314
        %s316 = sand.u32 %s60, 1
        %s317 = smul.addr %s316, 256
        %s318 = scalar_lea.vmem [#allocation5], %s317
        %p319 = pneg %p73
        %p320 = pneg %p70
        %s321 = sand.u32 %s26, 1
        %s322 = scalar_lea.sflag [#allocation6], %s321
        %s323 = sand.u32 %s86, 1
        %s324 = scalar_lea.vmem [#allocation7], %s323
        %p325 = pneg %p99
        %p326 = pneg %p96
        %p327 = pneg %p120
        %p328 = pneg %p117
        %p329 = pneg %p141
        %p330 = pneg %p138
        %p331 = pneg %p167
        %p332 = pneg %p164
        %s333 = sand.u32 %s154, 1
        %s334 = scalar_lea.sflag [#allocation4], %s333
        %s335 = sand.u32 %s154, 1
        %s336 = smul.addr %s335, 256
        %s337 = scalar_lea.vmem [#allocation10], %s336
        %s338 = smul.u32 16, %s26
        %s339 = smul.u32 16, %s26
        %s340 = smul.u32 16, %s26
        %v341 = vld [vmem:[%s277] sm:$0xff]
        %v342 = vld [vmem:[%s277 + $0x8] sm:$0xff]
        %v343 = vld [vmem:[%s277 + $0x10] sm:$0xff]
        %v344 = vld [vmem:[%s277 + $0x18] sm:$0xff]
        %v345 = vld [vmem:[%s277 + $0x20] sm:$0xff]
        %v346 = vld [vmem:[%s277 + $0x28] sm:$0xff]
        %v347 = vld [vmem:[%s277 + $0x30] sm:$0xff]
        %v348 = vld [vmem:[%s277 + $0x38] sm:$0xff]
        %v349 = vld [vmem:[%s277 + $0x40] sm:$0xff]
        %v350 = vld [vmem:[%s277 + $0x48] sm:$0xff]
        %v351 = vld [vmem:[%s277 + $0x50] sm:$0xff]
        %v352 = vld [vmem:[%s277 + $0x58] sm:$0xff]
        %v353 = vld [vmem:[%s277 + $0x60] sm:$0xff]
        %v354 = vld [vmem:[%s277 + $0x68] sm:$0xff]
        %v355 = vld [vmem:[%s277 + $0x70] sm:$0xff]
        %v356 = vld [vmem:[%s277 + $0x78] sm:$0xff]
        %v357 = vld [vmem:[%s277 + $0x80] sm:$0xff]
        %v358 = vld [vmem:[%s277 + $0x88] sm:$0xff]
        %v359 = vld [vmem:[%s277 + $0x90] sm:$0xff]
        %v360 = vld [vmem:[%s277 + $0x98] sm:$0xff]
        %v361 = vld [vmem:[%s277 + $0xa0] sm:$0xff]
        %v362 = vld [vmem:[%s277 + $0xa8] sm:$0xff]
        %v363 = vld [vmem:[%s277 + $0xb0] sm:$0xff]
        %v364 = vld [vmem:[%s277 + $0xb8] sm:$0xff]
        %v365 = vld [vmem:[%s277 + $0xc0] sm:$0xff]
        %v366 = vld [vmem:[%s277 + $0xc8] sm:$0xff]
        %v367 = vld [vmem:[%s277 + $0xd0] sm:$0xff]
        %v368 = vld [vmem:[%s277 + $0xd8] sm:$0xff]
        %v369 = vld [vmem:[%s277 + $0xe0] sm:$0xff]
        %v370 = vld [vmem:[%s277 + $0xe8] sm:$0xff]
        %v371 = vld [vmem:[%s277 + $0xf0] sm:$0xff]
        %v372 = vld [vmem:[%s277 + $0xf8] sm:$0xff]
        %v373 = vpack.c.bf16 %v343, %v341
        %v374 = vpack.c.bf16 %v344, %v342
        %v375 = vpack.c.bf16 %v347, %v345
        %v376 = vpack.c.bf16 %v348, %v346
        %v377 = vpack.c.bf16 %v351, %v349
        %v378 = vpack.c.bf16 %v352, %v350
        %v379 = vpack.c.bf16 %v355, %v353
        %v380 = vpack.c.bf16 %v356, %v354
        %v381 = vpack.c.bf16 %v359, %v357
        %v382 = vpack.c.bf16 %v360, %v358
        %v383 = vpack.c.bf16 %v363, %v361
        %v384 = vpack.c.bf16 %v364, %v362
        %v385 = vpack.c.bf16 %v367, %v365
        %v386 = vpack.c.bf16 %v368, %v366
        %v387 = vpack.c.bf16 %v371, %v369
        %v388 = vpack.c.bf16 %v372, %v370
        %v389 = vld [vmem:[%s287] sm:$0xff]
        %v390 = vld [vmem:[%s287 + $0x8] sm:$0xff]
        %v391 = vld [vmem:[%s287 + $0x10] sm:$0xff]
        %v392 = vld [vmem:[%s287 + $0x18] sm:$0xff]
        %v393 = vld [vmem:[%s287 + $0x20] sm:$0xff]
        %v394 = vld [vmem:[%s287 + $0x28] sm:$0xff]
        %v395 = vld [vmem:[%s287 + $0x30] sm:$0xff]
        %v396 = vld [vmem:[%s287 + $0x38] sm:$0xff]
        %v397 = vld [vmem:[%s287 + $0x40] sm:$0xff]
        %v398 = vld [vmem:[%s287 + $0x48] sm:$0xff]
        %v399 = vld [vmem:[%s287 + $0x50] sm:$0xff]
        %v400 = vld [vmem:[%s287 + $0x58] sm:$0xff]
        %v401 = vld [vmem:[%s287 + $0x60] sm:$0xff]
        %v402 = vld [vmem:[%s287 + $0x68] sm:$0xff]
        %v403 = vld [vmem:[%s287 + $0x70] sm:$0xff]
        %v404 = vld [vmem:[%s287 + $0x78] sm:$0xff]
        %v405 = vld [vmem:[%s287 + $0x80] sm:$0xff]
        %v406 = vld [vmem:[%s287 + $0x88] sm:$0xff]
        %v407 = vld [vmem:[%s287 + $0x90] sm:$0xff]
        %v408 = vld [vmem:[%s287 + $0x98] sm:$0xff]
        %v409 = vld [vmem:[%s287 + $0xa0] sm:$0xff]
        %v410 = vld [vmem:[%s287 + $0xa8] sm:$0xff]
        %v411 = vld [vmem:[%s287 + $0xb0] sm:$0xff]
        %v412 = vld [vmem:[%s287 + $0xb8] sm:$0xff]
        %v413 = vld [vmem:[%s287 + $0xc0] sm:$0xff]
        %v414 = vld [vmem:[%s287 + $0xc8] sm:$0xff]
        %v415 = vld [vmem:[%s287 + $0xd0] sm:$0xff]
        %v416 = vld [vmem:[%s287 + $0xd8] sm:$0xff]
        %v417 = vld [vmem:[%s287 + $0xe0] sm:$0xff]
        %v418 = vld [vmem:[%s287 + $0xe8] sm:$0xff]
        %v419 = vld [vmem:[%s287 + $0xf0] sm:$0xff]
        %v420 = vld [vmem:[%s287 + $0xf8] sm:$0xff]
        %v421 = vpack.c.bf16 %v391, %v389
        %v422 = vpack.c.bf16 %v392, %v390
        %v423 = vpack.c.bf16 %v395, %v393
        %v424 = vpack.c.bf16 %v396, %v394
        %v425 = vpack.c.bf16 %v399, %v397
        %v426 = vpack.c.bf16 %v400, %v398
        %v427 = vpack.c.bf16 %v403, %v401
        %v428 = vpack.c.bf16 %v404, %v402
        %v429 = vpack.c.bf16 %v407, %v405
        %v430 = vpack.c.bf16 %v408, %v406
        %v431 = vpack.c.bf16 %v411, %v409
        %v432 = vpack.c.bf16 %v412, %v410
        %v433 = vpack.c.bf16 %v415, %v413
        %v434 = vpack.c.bf16 %v416, %v414
        %v435 = vpack.c.bf16 %v419, %v417
        %v436 = vpack.c.bf16 %v420, %v418
        %v437 = vld [vmem:[#allocation8] sm:$0xff]
        %v438 = vld [vmem:[#allocation8 + $0x8] sm:$0xff]
        %v439 = vld [vmem:[#allocation8 + $0x10] sm:$0xff]
        %v440 = vld [vmem:[#allocation8 + $0x18] sm:$0xff]
        %v441 = vld [vmem:[#allocation8 + $0x20] sm:$0xff]
        %v442 = vld [vmem:[#allocation8 + $0x28] sm:$0xff]
        %v443 = vld [vmem:[#allocation8 + $0x30] sm:$0xff]
        %v444 = vld [vmem:[#allocation8 + $0x38] sm:$0xff]
        %v445 = vld [vmem:[#allocation8 + $0x40] sm:$0xff]
        %v446 = vld [vmem:[#allocation8 + $0x48] sm:$0xff]
        %v447 = vld [vmem:[#allocation8 + $0x50] sm:$0xff]
        %v448 = vld [vmem:[#allocation8 + $0x58] sm:$0xff]
        %v449 = vld [vmem:[#allocation8 + $0x60] sm:$0xff]
        %v450 = vld [vmem:[#allocation8 + $0x68] sm:$0xff]
        %v451 = vld [vmem:[#allocation8 + $0x70] sm:$0xff]
        %v452 = vld [vmem:[#allocation8 + $0x78] sm:$0xff]
        %v453 = vld [vmem:[#allocation8 + $0x80] sm:$0xff]
        %v454 = vld [vmem:[#allocation8 + $0x88] sm:$0xff]
        %v455 = vld [vmem:[#allocation8 + $0x90] sm:$0xff]
        %v456 = vld [vmem:[#allocation8 + $0x98] sm:$0xff]
        %v457 = vld [vmem:[#allocation8 + $0xa0] sm:$0xff]
        %v458 = vld [vmem:[#allocation8 + $0xa8] sm:$0xff]
        %v459 = vld [vmem:[#allocation8 + $0xb0] sm:$0xff]
        %v460 = vld [vmem:[#allocation8 + $0xb8] sm:$0xff]
        %v461 = vld [vmem:[#allocation8 + $0xc0] sm:$0xff]
        %v462 = vld [vmem:[#allocation8 + $0xc8] sm:$0xff]
        %v463 = vld [vmem:[#allocation8 + $0xd0] sm:$0xff]
        %v464 = vld [vmem:[#allocation8 + $0xd8] sm:$0xff]
        %v465 = vld [vmem:[#allocation8 + $0xe0] sm:$0xff]
        %v466 = vld [vmem:[#allocation8 + $0xe8] sm:$0xff]
        %v467 = vld [vmem:[#allocation8 + $0xf0] sm:$0xff]
        %v468 = vld [vmem:[#allocation8 + $0xf8] sm:$0xff]
        %v469 = vld [vmem:[%s4] sm:$0x3]
        %v471 = vperm.slane %v469, 0
        %v472 = vperm.slane %v469, 1
        %v507 = vunpack.c.l.b16 %v437
        %v508 = vunpack.c.h.b16 %v437
        %v509 = vunpack.c.l.b16 %v438
        %v510 = vunpack.c.h.b16 %v438
        %v511 = vunpack.c.l.b16 %v439
        %v512 = vunpack.c.h.b16 %v439
        %v513 = vunpack.c.l.b16 %v440
        %v514 = vunpack.c.h.b16 %v440
        %v515 = vunpack.c.l.b16 %v441
        %v516 = vunpack.c.h.b16 %v441
        %v517 = vunpack.c.l.b16 %v442
        %v518 = vunpack.c.h.b16 %v442
        %v519 = vunpack.c.l.b16 %v443
        %v520 = vunpack.c.h.b16 %v443
        %v521 = vunpack.c.l.b16 %v444
        %v522 = vunpack.c.h.b16 %v444
        %v523 = vunpack.c.l.b16 %v445
        %v524 = vunpack.c.h.b16 %v445
        %v525 = vunpack.c.l.b16 %v446
        %v526 = vunpack.c.h.b16 %v446
        %v527 = vunpack.c.l.b16 %v447
        %v528 = vunpack.c.h.b16 %v447
        %v529 = vunpack.c.l.b16 %v448
        %v530 = vunpack.c.h.b16 %v448
        %v531 = vunpack.c.l.b16 %v449
        %v532 = vunpack.c.h.b16 %v449
        %v533 = vunpack.c.l.b16 %v450
        %v534 = vunpack.c.h.b16 %v450
        %v535 = vunpack.c.l.b16 %v451
        %v536 = vunpack.c.h.b16 %v451
        %v537 = vunpack.c.l.b16 %v452
        %v538 = vunpack.c.h.b16 %v452
        %v539 = vunpack.c.l.b16 %v453
        %v540 = vunpack.c.h.b16 %v453
        %v541 = vunpack.c.l.b16 %v454
        %v542 = vunpack.c.h.b16 %v454
        %v543 = vunpack.c.l.b16 %v455
        %v544 = vunpack.c.h.b16 %v455
        %v545 = vunpack.c.l.b16 %v456
        %v546 = vunpack.c.h.b16 %v456
        %v547 = vunpack.c.l.b16 %v457
        %v548 = vunpack.c.h.b16 %v457
        %v549 = vunpack.c.l.b16 %v458
        %v550 = vunpack.c.h.b16 %v458
        %v551 = vunpack.c.l.b16 %v459
        %v552 = vunpack.c.h.b16 %v459
        %v553 = vunpack.c.l.b16 %v460
        %v554 = vunpack.c.h.b16 %v460
        %v555 = vunpack.c.l.b16 %v461
        %v556 = vunpack.c.h.b16 %v461
        %v557 = vunpack.c.l.b16 %v462
        %v558 = vunpack.c.h.b16 %v462
        %v559 = vunpack.c.l.b16 %v463
        %v560 = vunpack.c.h.b16 %v463
        %v561 = vunpack.c.l.b16 %v464
        %v562 = vunpack.c.h.b16 %v464
        %v563 = vunpack.c.l.b16 %v465
        %v564 = vunpack.c.h.b16 %v465
        %v565 = vunpack.c.l.b16 %v466
        %v566 = vunpack.c.h.b16 %v466
        %v567 = vunpack.c.l.b16 %v467
        %v568 = vunpack.c.h.b16 %v467
        %v569 = vunpack.c.l.b16 %v468
        %v570 = vunpack.c.h.b16 %v468
        %v571 = vpack.c.b16 %v509, %v507
        %v572 = vpack.c.b16 %v510, %v508
        %v573 = vpack.c.b16 %v513, %v511
        %v574 = vpack.c.b16 %v514, %v512
        %v575 = vpack.c.b16 %v517, %v515
        %v576 = vpack.c.b16 %v518, %v516
        %v577 = vpack.c.b16 %v521, %v519
        %v578 = vpack.c.b16 %v522, %v520
        %v579 = vpack.c.b16 %v525, %v523
        %v580 = vpack.c.b16 %v526, %v524
        %v581 = vpack.c.b16 %v529, %v527
        %v582 = vpack.c.b16 %v530, %v528
        %v583 = vpack.c.b16 %v533, %v531
        %v584 = vpack.c.b16 %v534, %v532
        %v585 = vpack.c.b16 %v537, %v535
        %v586 = vpack.c.b16 %v538, %v536
        %v587 = vpack.c.b16 %v541, %v539
        %v588 = vpack.c.b16 %v542, %v540
        %v589 = vpack.c.b16 %v545, %v543
        %v590 = vpack.c.b16 %v546, %v544
        %v591 = vpack.c.b16 %v549, %v547
        %v592 = vpack.c.b16 %v550, %v548
        %v593 = vpack.c.b16 %v553, %v551
        %v594 = vpack.c.b16 %v554, %v552
        %v595 = vpack.c.b16 %v557, %v555
        %v596 = vpack.c.b16 %v558, %v556
        %v597 = vpack.c.b16 %v561, %v559
        %v598 = vpack.c.b16 %v562, %v560
        %v599 = vpack.c.b16 %v565, %v563
        %v600 = vpack.c.b16 %v566, %v564
        %v601 = vpack.c.b16 %v569, %v567
        %v602 = vpack.c.b16 %v570, %v568
        %635 = vmatpush.bf16.msra.mxu0 %v585
        %636 = vmatpush.bf16.msra.mxu0 %v583
        %637 = vmatpush.bf16.msra.mxu0 %v581
        %638 = vmatpush.bf16.msra.mxu0 %v579
        %639 = vmatpush.bf16.msra.mxu0 %v577
        %640 = vmatpush.bf16.msra.mxu0 %v575
        %641 = vmatpush.bf16.msra.mxu0 %v573
        %642 = vmatpush.bf16.msra.mxu0 %v571
        %643 = vmatmul.bf16.gmra.mxu0 %v373
        %v644 = vpop.f32.mrf.mxu0
        %v645 = vadd.f32 %v471, %v644
        %v646 = vpop.f32.mrf.mxu0
        %v647 = vadd.f32 %v471, %v646
        %648 = vmatmul.bf16.gmra.mxu0 %v375
        %v649 = vpop.f32.mrf.mxu0
        %v650 = vadd.f32 %v471, %v649
        %v651 = vpop.f32.mrf.mxu0
        %v652 = vadd.f32 %v471, %v651
        %653 = vmatmul.bf16.gmra.mxu0 %v377
        %v654 = vpop.f32.mrf.mxu0
        %v655 = vadd.f32 %v471, %v654
        %v656 = vpop.f32.mrf.mxu0
        %v657 = vadd.f32 %v471, %v656
        %658 = vmatmul.bf16.gmra.mxu0 %v379
        %v659 = vpop.f32.mrf.mxu0
        %v660 = vadd.f32 %v471, %v659
        %v661 = vpop.f32.mrf.mxu0
        %v662 = vadd.f32 %v471, %v661
        %663 = vmatmul.bf16.gmra.mxu0 %v381
        %v664 = vpop.f32.mrf.mxu0
        %v665 = vadd.f32 %v471, %v664
        %v666 = vpop.f32.mrf.mxu0
        %v667 = vadd.f32 %v471, %v666
        %668 = vmatmul.bf16.gmra.mxu0 %v383
        %v669 = vpop.f32.mrf.mxu0
        %v670 = vadd.f32 %v471, %v669
        %v671 = vpop.f32.mrf.mxu0
        %v672 = vadd.f32 %v471, %v671
        %673 = vmatmul.bf16.gmra.mxu0 %v385
        %v674 = vpop.f32.mrf.mxu0
        %v675 = vadd.f32 %v471, %v674
        %v676 = vpop.f32.mrf.mxu0
        %v677 = vadd.f32 %v471, %v676
        %678 = vmatmul.bf16.gmra.mxu0 %v387
        %v679 = vpop.f32.mrf.mxu0
        %v680 = vadd.f32 %v471, %v679
        %v681 = vpop.f32.mrf.mxu0
        %v682 = vadd.f32 %v471, %v681
        %683 = vdwg.mxu0
        %684 = vmatpush.bf16.msra.mxu0 %v601
        %685 = vmatpush.bf16.msra.mxu0 %v599
        %686 = vmatpush.bf16.msra.mxu0 %v597
        %687 = vmatpush.bf16.msra.mxu0 %v595
        %688 = vmatpush.bf16.msra.mxu0 %v593
        %689 = vmatpush.bf16.msra.mxu0 %v591
        %690 = vmatpush.bf16.msra.mxu0 %v589
        %691 = vmatpush.bf16.msra.mxu0 %v587
        %692 = vmatmul.bf16.gmra.mxu0 %v374
        %v693 = vpop.f32.mrf.mxu0
        %v694 = vadd.f32 %v645, %v693
        %v695 = vpop.f32.mrf.mxu0
        %v696 = vadd.f32 %v647, %v695
        %697 = vmatmul.bf16.gmra.mxu0 %v376
        %v698 = vpop.f32.mrf.mxu0
        %v699 = vadd.f32 %v650, %v698
        %v700 = vpop.f32.mrf.mxu0
        %v701 = vadd.f32 %v652, %v700
        %702 = vmatmul.bf16.gmra.mxu0 %v378
        %v703 = vpop.f32.mrf.mxu0
        %v704 = vadd.f32 %v655, %v703
        %v705 = vpop.f32.mrf.mxu0
        %v706 = vadd.f32 %v657, %v705
        %707 = vmatmul.bf16.gmra.mxu0 %v380
        %v708 = vpop.f32.mrf.mxu0
        %v709 = vadd.f32 %v660, %v708
        %v710 = vpop.f32.mrf.mxu0
        %v711 = vadd.f32 %v662, %v710
        %712 = vmatmul.bf16.gmra.mxu0 %v382
        %v713 = vpop.f32.mrf.mxu0
        %v714 = vadd.f32 %v665, %v713
        %v715 = vpop.f32.mrf.mxu0
        %v716 = vadd.f32 %v667, %v715
        %717 = vmatmul.bf16.gmra.mxu0 %v384
        %v718 = vpop.f32.mrf.mxu0
        %v719 = vadd.f32 %v670, %v718
        %v720 = vpop.f32.mrf.mxu0
        %v721 = vadd.f32 %v672, %v720
        %722 = vmatmul.bf16.gmra.mxu0 %v386
        %v723 = vpop.f32.mrf.mxu0
        %v724 = vadd.f32 %v675, %v723
        %v725 = vpop.f32.mrf.mxu0
        %v726 = vadd.f32 %v677, %v725
        %727 = vmatmul.bf16.gmra.mxu0 %v388
        %v728 = vpop.f32.mrf.mxu0
        %v729 = vadd.f32 %v680, %v728
        %v730 = vpop.f32.mrf.mxu0
        %v731 = vadd.f32 %v682, %v730
        %732 = vdwg.mxu0
        %733 = vmatpush.bf16.msra.mxu0 %v586
        %734 = vmatpush.bf16.msra.mxu0 %v584
        %735 = vmatpush.bf16.msra.mxu0 %v582
        %736 = vmatpush.bf16.msra.mxu0 %v580
        %737 = vmatpush.bf16.msra.mxu0 %v578
        %738 = vmatpush.bf16.msra.mxu0 %v576
        %739 = vmatpush.bf16.msra.mxu0 %v574
        %740 = vmatpush.bf16.msra.mxu0 %v572
        %741 = vmatmul.bf16.gmra.mxu0 %v373
        %v742 = vpop.f32.mrf.mxu0
        %v743 = vadd.f32 %v472, %v742
        %v744 = vpop.f32.mrf.mxu0
        %v745 = vadd.f32 %v472, %v744
        %746 = vmatmul.bf16.gmra.mxu0 %v375
        %v747 = vpop.f32.mrf.mxu0
        %v748 = vadd.f32 %v472, %v747
        %v749 = vpop.f32.mrf.mxu0
        %v750 = vadd.f32 %v472, %v749
        %751 = vmatmul.bf16.gmra.mxu0 %v377
        %v752 = vpop.f32.mrf.mxu0
        %v753 = vadd.f32 %v472, %v752
        %v754 = vpop.f32.mrf.mxu0
        %v755 = vadd.f32 %v472, %v754
        %756 = vmatmul.bf16.gmra.mxu0 %v379
        %v757 = vpop.f32.mrf.mxu0
        %v758 = vadd.f32 %v472, %v757
        %v759 = vpop.f32.mrf.mxu0
        %v760 = vadd.f32 %v472, %v759
        %761 = vmatmul.bf16.gmra.mxu0 %v381
        %v762 = vpop.f32.mrf.mxu0
        %v763 = vadd.f32 %v472, %v762
        %v764 = vpop.f32.mrf.mxu0
        %v765 = vadd.f32 %v472, %v764
        %766 = vmatmul.bf16.gmra.mxu0 %v383
        %v767 = vpop.f32.mrf.mxu0
        %v768 = vadd.f32 %v472, %v767
        %v769 = vpop.f32.mrf.mxu0
        %v770 = vadd.f32 %v472, %v769
        %771 = vmatmul.bf16.gmra.mxu0 %v385
        %v772 = vpop.f32.mrf.mxu0
        %v773 = vadd.f32 %v472, %v772
        %v774 = vpop.f32.mrf.mxu0
        %v775 = vadd.f32 %v472, %v774
        %776 = vmatmul.bf16.gmra.mxu0 %v387
        %v777 = vpop.f32.mrf.mxu0
        %v778 = vadd.f32 %v472, %v777
        %v779 = vpop.f32.mrf.mxu0
        %v780 = vadd.f32 %v472, %v779
        %781 = vdwg.mxu0
        %782 = vmatpush.bf16.msra.mxu0 %v602
        %783 = vmatpush.bf16.msra.mxu0 %v600
        %784 = vmatpush.bf16.msra.mxu0 %v598
        %785 = vmatpush.bf16.msra.mxu0 %v596
        %786 = vmatpush.bf16.msra.mxu0 %v594
        %787 = vmatpush.bf16.msra.mxu0 %v592
        %788 = vmatpush.bf16.msra.mxu0 %v590
        %789 = vmatpush.bf16.msra.mxu0 %v588
        %790 = vmatmul.bf16.gmra.mxu0 %v374
        %v791 = vpop.f32.mrf.mxu0
        %v792 = vadd.f32 %v743, %v791
        %v793 = vpop.f32.mrf.mxu0
        %v794 = vadd.f32 %v745, %v793
        %795 = vmatmul.bf16.gmra.mxu0 %v376
        %v796 = vpop.f32.mrf.mxu0
        %v797 = vadd.f32 %v748, %v796
        %v798 = vpop.f32.mrf.mxu0
        %v799 = vadd.f32 %v750, %v798
        %800 = vmatmul.bf16.gmra.mxu0 %v378
        %v801 = vpop.f32.mrf.mxu0
        %v802 = vadd.f32 %v753, %v801
        %v803 = vpop.f32.mrf.mxu0
        %v804 = vadd.f32 %v755, %v803
        %805 = vmatmul.bf16.gmra.mxu0 %v380
        %v806 = vpop.f32.mrf.mxu0
        %v807 = vadd.f32 %v758, %v806
        %v808 = vpop.f32.mrf.mxu0
        %v809 = vadd.f32 %v760, %v808
        %810 = vmatmul.bf16.gmra.mxu0 %v382
        %v811 = vpop.f32.mrf.mxu0
        %v812 = vadd.f32 %v763, %v811
        %v813 = vpop.f32.mrf.mxu0
        %v814 = vadd.f32 %v765, %v813
        %815 = vmatmul.bf16.gmra.mxu0 %v384
        %v816 = vpop.f32.mrf.mxu0
        %v817 = vadd.f32 %v768, %v816
        %v818 = vpop.f32.mrf.mxu0
        %v819 = vadd.f32 %v770, %v818
        %820 = vmatmul.bf16.gmra.mxu0 %v386
        %v821 = vpop.f32.mrf.mxu0
        %v822 = vadd.f32 %v773, %v821
        %v823 = vpop.f32.mrf.mxu0
        %v824 = vadd.f32 %v775, %v823
        %825 = vmatmul.bf16.gmra.mxu0 %v388
        %v826 = vpop.f32.mrf.mxu0
        %v827 = vadd.f32 %v778, %v826
        %v828 = vpop.f32.mrf.mxu0
        %v829 = vadd.f32 %v780, %v828
        %830 = vdwg.mxu0
        %v831 = vpack.c.bf16 %v792, %v694
        %v832 = vpack.c.bf16 %v794, %v696
        %v833 = vpack.c.bf16 %v797, %v699
        %v834 = vpack.c.bf16 %v799, %v701
        %v835 = vpack.c.bf16 %v802, %v704
        %v836 = vpack.c.bf16 %v804, %v706
        %v837 = vpack.c.bf16 %v807, %v709
        %v838 = vpack.c.bf16 %v809, %v711
        %v839 = vpack.c.bf16 %v812, %v714
        %v840 = vpack.c.bf16 %v814, %v716
        %v841 = vpack.c.bf16 %v817, %v719
        %v842 = vpack.c.bf16 %v819, %v721
        %v843 = vpack.c.bf16 %v822, %v724
        %v844 = vpack.c.bf16 %v824, %v726
        %v845 = vpack.c.bf16 %v827, %v729
        %v846 = vpack.c.bf16 %v829, %v731
        %s847 = scalar_lea.vmem [#allocation8], 256
        %v848 = vld [vmem:[%s847] sm:$0xff]
        %v849 = vld [vmem:[%s847 + $0x8] sm:$0xff]
        %v850 = vld [vmem:[%s847 + $0x10] sm:$0xff]
        %v851 = vld [vmem:[%s847 + $0x18] sm:$0xff]
        %v852 = vld [vmem:[%s847 + $0x20] sm:$0xff]
        %v853 = vld [vmem:[%s847 + $0x28] sm:$0xff]
        %v854 = vld [vmem:[%s847 + $0x30] sm:$0xff]
        %v855 = vld [vmem:[%s847 + $0x38] sm:$0xff]
        %v856 = vld [vmem:[%s847 + $0x40] sm:$0xff]
        %v857 = vld [vmem:[%s847 + $0x48] sm:$0xff]
        %v858 = vld [vmem:[%s847 + $0x50] sm:$0xff]
        %v859 = vld [vmem:[%s847 + $0x58] sm:$0xff]
        %v860 = vld [vmem:[%s847 + $0x60] sm:$0xff]
        %v861 = vld [vmem:[%s847 + $0x68] sm:$0xff]
        %v862 = vld [vmem:[%s847 + $0x70] sm:$0xff]
        %v863 = vld [vmem:[%s847 + $0x78] sm:$0xff]
        %v864 = vld [vmem:[%s847 + $0x80] sm:$0xff]
        %v865 = vld [vmem:[%s847 + $0x88] sm:$0xff]
        %v866 = vld [vmem:[%s847 + $0x90] sm:$0xff]
        %v867 = vld [vmem:[%s847 + $0x98] sm:$0xff]
        %v868 = vld [vmem:[%s847 + $0xa0] sm:$0xff]
        %v869 = vld [vmem:[%s847 + $0xa8] sm:$0xff]
        %v870 = vld [vmem:[%s847 + $0xb0] sm:$0xff]
        %v871 = vld [vmem:[%s847 + $0xb8] sm:$0xff]
        %v872 = vld [vmem:[%s847 + $0xc0] sm:$0xff]
        %v873 = vld [vmem:[%s847 + $0xc8] sm:$0xff]
        %v874 = vld [vmem:[%s847 + $0xd0] sm:$0xff]
        %v875 = vld [vmem:[%s847 + $0xd8] sm:$0xff]
        %v876 = vld [vmem:[%s847 + $0xe0] sm:$0xff]
        %v877 = vld [vmem:[%s847 + $0xe8] sm:$0xff]
        %v878 = vld [vmem:[%s847 + $0xf0] sm:$0xff]
        %v879 = vld [vmem:[%s847 + $0xf8] sm:$0xff]
        %s880 = scalar_lea.vmem %s4, 2
        %v881 = vld [vmem:[%s880] sm:$0x3]
        %v883 = vperm.slane %v881, 0
        %v884 = vperm.slane %v881, 1
        %v919 = vunpack.c.l.b16 %v848
        %v920 = vunpack.c.h.b16 %v848
        %v921 = vunpack.c.l.b16 %v849
        %v922 = vunpack.c.h.b16 %v849
        %v923 = vunpack.c.l.b16 %v850
        %v924 = vunpack.c.h.b16 %v850
        %v925 = vunpack.c.l.b16 %v851
        %v926 = vunpack.c.h.b16 %v851
        %v927 = vunpack.c.l.b16 %v852
        %v928 = vunpack.c.h.b16 %v852
        %v929 = vunpack.c.l.b16 %v853
        %v930 = vunpack.c.h.b16 %v853
        %v931 = vunpack.c.l.b16 %v854
        %v932 = vunpack.c.h.b16 %v854
        %v933 = vunpack.c.l.b16 %v855
        %v934 = vunpack.c.h.b16 %v855
        %v935 = vunpack.c.l.b16 %v856
        %v936 = vunpack.c.h.b16 %v856
        %v937 = vunpack.c.l.b16 %v857
        %v938 = vunpack.c.h.b16 %v857
        %v939 = vunpack.c.l.b16 %v858
        %v940 = vunpack.c.h.b16 %v858
        %v941 = vunpack.c.l.b16 %v859
        %v942 = vunpack.c.h.b16 %v859
        %v943 = vunpack.c.l.b16 %v860
        %v944 = vunpack.c.h.b16 %v860
        %v945 = vunpack.c.l.b16 %v861
        %v946 = vunpack.c.h.b16 %v861
        %v947 = vunpack.c.l.b16 %v862
        %v948 = vunpack.c.h.b16 %v862
        %v949 = vunpack.c.l.b16 %v863
        %v950 = vunpack.c.h.b16 %v863
        %v951 = vunpack.c.l.b16 %v864
        %v952 = vunpack.c.h.b16 %v864
        %v953 = vunpack.c.l.b16 %v865
        %v954 = vunpack.c.h.b16 %v865
        %v955 = vunpack.c.l.b16 %v866
        %v956 = vunpack.c.h.b16 %v866
        %v957 = vunpack.c.l.b16 %v867
        %v958 = vunpack.c.h.b16 %v867
        %v959 = vunpack.c.l.b16 %v868
        %v960 = vunpack.c.h.b16 %v868
        %v961 = vunpack.c.l.b16 %v869
        %v962 = vunpack.c.h.b16 %v869
        %v963 = vunpack.c.l.b16 %v870
        %v964 = vunpack.c.h.b16 %v870
        %v965 = vunpack.c.l.b16 %v871
        %v966 = vunpack.c.h.b16 %v871
        %v967 = vunpack.c.l.b16 %v872
        %v968 = vunpack.c.h.b16 %v872
        %v969 = vunpack.c.l.b16 %v873
        %v970 = vunpack.c.h.b16 %v873
        %v971 = vunpack.c.l.b16 %v874
        %v972 = vunpack.c.h.b16 %v874
        %v973 = vunpack.c.l.b16 %v875
        %v974 = vunpack.c.h.b16 %v875
        %v975 = vunpack.c.l.b16 %v876
        %v976 = vunpack.c.h.b16 %v876
        %v977 = vunpack.c.l.b16 %v877
        %v978 = vunpack.c.h.b16 %v877
        %v979 = vunpack.c.l.b16 %v878
        %v980 = vunpack.c.h.b16 %v878
        %v981 = vunpack.c.l.b16 %v879
        %v982 = vunpack.c.h.b16 %v879
        %v983 = vpack.c.b16 %v921, %v919
        %v984 = vpack.c.b16 %v922, %v920
        %v985 = vpack.c.b16 %v925, %v923
        %v986 = vpack.c.b16 %v926, %v924
        %v987 = vpack.c.b16 %v929, %v927
        %v988 = vpack.c.b16 %v930, %v928
        %v989 = vpack.c.b16 %v933, %v931
        %v990 = vpack.c.b16 %v934, %v932
        %v991 = vpack.c.b16 %v937, %v935
        %v992 = vpack.c.b16 %v938, %v936
        %v993 = vpack.c.b16 %v941, %v939
        %v994 = vpack.c.b16 %v942, %v940
        %v995 = vpack.c.b16 %v945, %v943
        %v996 = vpack.c.b16 %v946, %v944
        %v997 = vpack.c.b16 %v949, %v947
        %v998 = vpack.c.b16 %v950, %v948
        %v999 = vpack.c.b16 %v953, %v951
        %v1000 = vpack.c.b16 %v954, %v952
        %v1001 = vpack.c.b16 %v957, %v955
        %v1002 = vpack.c.b16 %v958, %v956
        %v1003 = vpack.c.b16 %v961, %v959
        %v1004 = vpack.c.b16 %v962, %v960
        %v1005 = vpack.c.b16 %v965, %v963
        %v1006 = vpack.c.b16 %v966, %v964
        %v1007 = vpack.c.b16 %v969, %v967
        %v1008 = vpack.c.b16 %v970, %v968
        %v1009 = vpack.c.b16 %v973, %v971
        %v1010 = vpack.c.b16 %v974, %v972
        %v1011 = vpack.c.b16 %v977, %v975
        %v1012 = vpack.c.b16 %v978, %v976
        %v1013 = vpack.c.b16 %v981, %v979
        %v1014 = vpack.c.b16 %v982, %v980
        %1047 = vmatpush.bf16.msra.mxu0 %v997
        %1048 = vmatpush.bf16.msra.mxu0 %v995
        %1049 = vmatpush.bf16.msra.mxu0 %v993
        %1050 = vmatpush.bf16.msra.mxu0 %v991
        %1051 = vmatpush.bf16.msra.mxu0 %v989
        %1052 = vmatpush.bf16.msra.mxu0 %v987
        %1053 = vmatpush.bf16.msra.mxu0 %v985
        %1054 = vmatpush.bf16.msra.mxu0 %v983
        %1055 = vmatmul.bf16.gmra.mxu0 %v421
        %v1056 = vpop.f32.mrf.mxu0
        %v1057 = vadd.f32 %v883, %v1056
        %v1058 = vpop.f32.mrf.mxu0
        %v1059 = vadd.f32 %v883, %v1058
        %1060 = vmatmul.bf16.gmra.mxu0 %v423
        %v1061 = vpop.f32.mrf.mxu0
        %v1062 = vadd.f32 %v883, %v1061
        %v1063 = vpop.f32.mrf.mxu0
        %v1064 = vadd.f32 %v883, %v1063
        %1065 = vmatmul.bf16.gmra.mxu0 %v425
        %v1066 = vpop.f32.mrf.mxu0
        %v1067 = vadd.f32 %v883, %v1066
        %v1068 = vpop.f32.mrf.mxu0
        %v1069 = vadd.f32 %v883, %v1068
        %1070 = vmatmul.bf16.gmra.mxu0 %v427
        %v1071 = vpop.f32.mrf.mxu0
        %v1072 = vadd.f32 %v883, %v1071
        %v1073 = vpop.f32.mrf.mxu0
        %v1074 = vadd.f32 %v883, %v1073
        %1075 = vmatmul.bf16.gmra.mxu0 %v429
        %v1076 = vpop.f32.mrf.mxu0
        %v1077 = vadd.f32 %v883, %v1076
        %v1078 = vpop.f32.mrf.mxu0
        %v1079 = vadd.f32 %v883, %v1078
        %1080 = vmatmul.bf16.gmra.mxu0 %v431
        %v1081 = vpop.f32.mrf.mxu0
        %v1082 = vadd.f32 %v883, %v1081
        %v1083 = vpop.f32.mrf.mxu0
        %v1084 = vadd.f32 %v883, %v1083
        %1085 = vmatmul.bf16.gmra.mxu0 %v433
        %v1086 = vpop.f32.mrf.mxu0
        %v1087 = vadd.f32 %v883, %v1086
        %v1088 = vpop.f32.mrf.mxu0
        %v1089 = vadd.f32 %v883, %v1088
        %1090 = vmatmul.bf16.gmra.mxu0 %v435
        %v1091 = vpop.f32.mrf.mxu0
        %v1092 = vadd.f32 %v883, %v1091
        %v1093 = vpop.f32.mrf.mxu0
        %v1094 = vadd.f32 %v883, %v1093
        %1095 = vdwg.mxu0
        %1096 = vmatpush.bf16.msra.mxu0 %v1013
        %1097 = vmatpush.bf16.msra.mxu0 %v1011
        %1098 = vmatpush.bf16.msra.mxu0 %v1009
        %1099 = vmatpush.bf16.msra.mxu0 %v1007
        %1100 = vmatpush.bf16.msra.mxu0 %v1005
        %1101 = vmatpush.bf16.msra.mxu0 %v1003
        %1102 = vmatpush.bf16.msra.mxu0 %v1001
        %1103 = vmatpush.bf16.msra.mxu0 %v999
        %1104 = vmatmul.bf16.gmra.mxu0 %v422
        %v1105 = vpop.f32.mrf.mxu0
        %v1106 = vadd.f32 %v1057, %v1105
        %v1107 = vpop.f32.mrf.mxu0
        %v1108 = vadd.f32 %v1059, %v1107
        %1109 = vmatmul.bf16.gmra.mxu0 %v424
        %v1110 = vpop.f32.mrf.mxu0
        %v1111 = vadd.f32 %v1062, %v1110
        %v1112 = vpop.f32.mrf.mxu0
        %v1113 = vadd.f32 %v1064, %v1112
        %1114 = vmatmul.bf16.gmra.mxu0 %v426
        %v1115 = vpop.f32.mrf.mxu0
        %v1116 = vadd.f32 %v1067, %v1115
        %v1117 = vpop.f32.mrf.mxu0
        %v1118 = vadd.f32 %v1069, %v1117
        %1119 = vmatmul.bf16.gmra.mxu0 %v428
        %v1120 = vpop.f32.mrf.mxu0
        %v1121 = vadd.f32 %v1072, %v1120
        %v1122 = vpop.f32.mrf.mxu0
        %v1123 = vadd.f32 %v1074, %v1122
        %1124 = vmatmul.bf16.gmra.mxu0 %v430
        %v1125 = vpop.f32.mrf.mxu0
        %v1126 = vadd.f32 %v1077, %v1125
        %v1127 = vpop.f32.mrf.mxu0
        %v1128 = vadd.f32 %v1079, %v1127
        %1129 = vmatmul.bf16.gmra.mxu0 %v432
        %v1130 = vpop.f32.mrf.mxu0
        %v1131 = vadd.f32 %v1082, %v1130
        %v1132 = vpop.f32.mrf.mxu0
        %v1133 = vadd.f32 %v1084, %v1132
        %1134 = vmatmul.bf16.gmra.mxu0 %v434
        %v1135 = vpop.f32.mrf.mxu0
        %v1136 = vadd.f32 %v1087, %v1135
        %v1137 = vpop.f32.mrf.mxu0
        %v1138 = vadd.f32 %v1089, %v1137
        %1139 = vmatmul.bf16.gmra.mxu0 %v436
        %v1140 = vpop.f32.mrf.mxu0
        %v1141 = vadd.f32 %v1092, %v1140
        %v1142 = vpop.f32.mrf.mxu0
        %v1143 = vadd.f32 %v1094, %v1142
        %1144 = vdwg.mxu0
        %1145 = vmatpush.bf16.msra.mxu0 %v998
        %1146 = vmatpush.bf16.msra.mxu0 %v996
        %1147 = vmatpush.bf16.msra.mxu0 %v994
        %1148 = vmatpush.bf16.msra.mxu0 %v992
        %1149 = vmatpush.bf16.msra.mxu0 %v990
        %1150 = vmatpush.bf16.msra.mxu0 %v988
        %1151 = vmatpush.bf16.msra.mxu0 %v986
        %1152 = vmatpush.bf16.msra.mxu0 %v984
        %1153 = vmatmul.bf16.gmra.mxu0 %v421
        %v1154 = vpop.f32.mrf.mxu0
        %v1155 = vadd.f32 %v884, %v1154
        %v1156 = vpop.f32.mrf.mxu0
        %v1157 = vadd.f32 %v884, %v1156
        %1158 = vmatmul.bf16.gmra.mxu0 %v423
        %v1159 = vpop.f32.mrf.mxu0
        %v1160 = vadd.f32 %v884, %v1159
        %v1161 = vpop.f32.mrf.mxu0
        %v1162 = vadd.f32 %v884, %v1161
        %1163 = vmatmul.bf16.gmra.mxu0 %v425
        %v1164 = vpop.f32.mrf.mxu0
        %v1165 = vadd.f32 %v884, %v1164
        %v1166 = vpop.f32.mrf.mxu0
        %v1167 = vadd.f32 %v884, %v1166
        %1168 = vmatmul.bf16.gmra.mxu0 %v427
        %v1169 = vpop.f32.mrf.mxu0
        %v1170 = vadd.f32 %v884, %v1169
        %v1171 = vpop.f32.mrf.mxu0
        %v1172 = vadd.f32 %v884, %v1171
        %1173 = vmatmul.bf16.gmra.mxu0 %v429
        %v1174 = vpop.f32.mrf.mxu0
        %v1175 = vadd.f32 %v884, %v1174
        %v1176 = vpop.f32.mrf.mxu0
        %v1177 = vadd.f32 %v884, %v1176
        %1178 = vmatmul.bf16.gmra.mxu0 %v431
        %v1179 = vpop.f32.mrf.mxu0
        %v1180 = vadd.f32 %v884, %v1179
        %v1181 = vpop.f32.mrf.mxu0
        %v1182 = vadd.f32 %v884, %v1181
        %1183 = vmatmul.bf16.gmra.mxu0 %v433
        %v1184 = vpop.f32.mrf.mxu0
        %v1185 = vadd.f32 %v884, %v1184
        %v1186 = vpop.f32.mrf.mxu0
        %v1187 = vadd.f32 %v884, %v1186
        %1188 = vmatmul.bf16.gmra.mxu0 %v435
        %v1189 = vpop.f32.mrf.mxu0
        %v1190 = vadd.f32 %v884, %v1189
        %v1191 = vpop.f32.mrf.mxu0
        %v1192 = vadd.f32 %v884, %v1191
        %1193 = vdwg.mxu0
        %1194 = vmatpush.bf16.msra.mxu0 %v1014
        %1195 = vmatpush.bf16.msra.mxu0 %v1012
        %1196 = vmatpush.bf16.msra.mxu0 %v1010
        %1197 = vmatpush.bf16.msra.mxu0 %v1008
        %1198 = vmatpush.bf16.msra.mxu0 %v1006
        %1199 = vmatpush.bf16.msra.mxu0 %v1004
        %1200 = vmatpush.bf16.msra.mxu0 %v1002
        %1201 = vmatpush.bf16.msra.mxu0 %v1000
        %1202 = vmatmul.bf16.gmra.mxu0 %v422
        %v1203 = vpop.f32.mrf.mxu0
        %v1204 = vadd.f32 %v1155, %v1203
        %v1205 = vpop.f32.mrf.mxu0
        %v1206 = vadd.f32 %v1157, %v1205
        %1207 = vmatmul.bf16.gmra.mxu0 %v424
        %v1208 = vpop.f32.mrf.mxu0
        %v1209 = vadd.f32 %v1160, %v1208
        %v1210 = vpop.f32.mrf.mxu0
        %v1211 = vadd.f32 %v1162, %v1210
        %1212 = vmatmul.bf16.gmra.mxu0 %v426
        %v1213 = vpop.f32.mrf.mxu0
        %v1214 = vadd.f32 %v1165, %v1213
        %v1215 = vpop.f32.mrf.mxu0
        %v1216 = vadd.f32 %v1167, %v1215
        %1217 = vmatmul.bf16.gmra.mxu0 %v428
        %v1218 = vpop.f32.mrf.mxu0
        %v1219 = vadd.f32 %v1170, %v1218
        %v1220 = vpop.f32.mrf.mxu0
        %v1221 = vadd.f32 %v1172, %v1220
        %1222 = vmatmul.bf16.gmra.mxu0 %v430
        %v1223 = vpop.f32.mrf.mxu0
        %v1224 = vadd.f32 %v1175, %v1223
        %v1225 = vpop.f32.mrf.mxu0
        %v1226 = vadd.f32 %v1177, %v1225
        %1227 = vmatmul.bf16.gmra.mxu0 %v432
        %v1228 = vpop.f32.mrf.mxu0
        %v1229 = vadd.f32 %v1180, %v1228
        %v1230 = vpop.f32.mrf.mxu0
        %v1231 = vadd.f32 %v1182, %v1230
        %1232 = vmatmul.bf16.gmra.mxu0 %v434
        %v1233 = vpop.f32.mrf.mxu0
        %v1234 = vadd.f32 %v1185, %v1233
        %v1235 = vpop.f32.mrf.mxu0
        %v1236 = vadd.f32 %v1187, %v1235
        %1237 = vmatmul.bf16.gmra.mxu0 %v436
        %v1238 = vpop.f32.mrf.mxu0
        %v1239 = vadd.f32 %v1190, %v1238
        %v1240 = vpop.f32.mrf.mxu0
        %v1241 = vadd.f32 %v1192, %v1240
        %1242 = vdwg.mxu0
        %v1243 = vpack.c.bf16 %v1204, %v1106
        %v1244 = vpack.c.bf16 %v1206, %v1108
        %v1245 = vpack.c.bf16 %v1209, %v1111
        %v1246 = vpack.c.bf16 %v1211, %v1113
        %v1247 = vpack.c.bf16 %v1214, %v1116
        %v1248 = vpack.c.bf16 %v1216, %v1118
        %v1249 = vpack.c.bf16 %v1219, %v1121
        %v1250 = vpack.c.bf16 %v1221, %v1123
        %v1251 = vpack.c.bf16 %v1224, %v1126
        %v1252 = vpack.c.bf16 %v1226, %v1128
        %v1253 = vpack.c.bf16 %v1229, %v1131
        %v1254 = vpack.c.bf16 %v1231, %v1133
        %v1255 = vpack.c.bf16 %v1234, %v1136
        %v1256 = vpack.c.bf16 %v1236, %v1138
        %v1257 = vpack.c.bf16 %v1239, %v1141
        %v1258 = vpack.c.bf16 %v1241, %v1143
        %v1259 = vld [vmem:[%s296] sm:$0x1]
        %vm1260 = vcmp.eq.f32.partialorder %v1259, 0.0
        %v1261 = vsel %vm1260, 1, 0
        %v1262 = vcvt.s32.f32 %v1261
        %v1264 = vperm.slane %v1262, 0
        %v1282 = vunpack.c.l.b16 %v831
        %v1283 = vunpack.c.l.b16 %v832
        %v1284 = vunpack.c.l.b16 %v833
        %v1285 = vunpack.c.l.b16 %v834
        %v1286 = vunpack.c.l.b16 %v835
        %v1287 = vunpack.c.l.b16 %v836
        %v1288 = vunpack.c.l.b16 %v837
        %v1289 = vunpack.c.l.b16 %v838
        %v1290 = vunpack.c.l.b16 %v839
        %v1291 = vunpack.c.l.b16 %v840
        %v1292 = vunpack.c.l.b16 %v841
        %v1293 = vunpack.c.l.b16 %v842
        %v1294 = vunpack.c.l.b16 %v843
        %v1295 = vunpack.c.l.b16 %v844
        %v1296 = vunpack.c.l.b16 %v845
        %v1297 = vunpack.c.l.b16 %v846
        %v1298 = vpack.c.b16 %v1283, %v1282
        %v1299 = vpack.c.b16 %v1285, %v1284
        %v1300 = vpack.c.b16 %v1287, %v1286
        %v1301 = vpack.c.b16 %v1289, %v1288
        %v1302 = vpack.c.b16 %v1291, %v1290
        %v1303 = vpack.c.b16 %v1293, %v1292
        %v1304 = vpack.c.b16 %v1295, %v1294
        %v1305 = vpack.c.b16 %v1297, %v1296
        %v1330 = vunpack.c.l.b16 %v1243
        %v1331 = vunpack.c.l.b16 %v1244
        %v1332 = vunpack.c.l.b16 %v1245
        %v1333 = vunpack.c.l.b16 %v1246
        %v1334 = vunpack.c.l.b16 %v1247
        %v1335 = vunpack.c.l.b16 %v1248
        %v1336 = vunpack.c.l.b16 %v1249
        %v1337 = vunpack.c.l.b16 %v1250
        %v1338 = vunpack.c.l.b16 %v1251
        %v1339 = vunpack.c.l.b16 %v1252
        %v1340 = vunpack.c.l.b16 %v1253
        %v1341 = vunpack.c.l.b16 %v1254
        %v1342 = vunpack.c.l.b16 %v1255
        %v1343 = vunpack.c.l.b16 %v1256
        %v1344 = vunpack.c.l.b16 %v1257
        %v1345 = vunpack.c.l.b16 %v1258
        %v1346 = vpack.c.b16 %v1331, %v1330
        %v1347 = vpack.c.b16 %v1333, %v1332
        %v1348 = vpack.c.b16 %v1335, %v1334
        %v1349 = vpack.c.b16 %v1337, %v1336
        %v1350 = vpack.c.b16 %v1339, %v1338
        %v1351 = vpack.c.b16 %v1341, %v1340
        %v1352 = vpack.c.b16 %v1343, %v1342
        %v1353 = vpack.c.b16 %v1345, %v1344
        %1362 = vmatpush.bf16.msra.mxu0 %v1353
        %1363 = vmatpush.bf16.msra.mxu0 %v1352
        %1364 = vmatpush.bf16.msra.mxu0 %v1351
        %1365 = vmatpush.bf16.msra.mxu0 %v1350
        %1366 = vmatpush.bf16.msra.mxu0 %v1349
        %1367 = vmatpush.bf16.msra.mxu0 %v1348
        %1368 = vmatpush.bf16.msra.mxu0 %v1347
        %1369 = vmatpush.bf16.msra.mxu0 %v1346
        %1370 = vmatmul.bf16.gmra.mxu0 %v1298
        %v1371 = vpop.f32.mrf.mxu0
        %v1372 = vadd.f32 %v1264, %v1371
        %v1373 = vpop.f32.mrf.mxu0
        %v1374 = vadd.f32 %v1264, %v1373
        %1375 = vmatmul.bf16.gmra.mxu0 %v1299
        %v1376 = vpop.f32.mrf.mxu0
        %v1377 = vadd.f32 %v1264, %v1376
        %v1378 = vpop.f32.mrf.mxu0
        %v1379 = vadd.f32 %v1264, %v1378
        %1380 = vmatmul.bf16.gmra.mxu0 %v1300
        %v1381 = vpop.f32.mrf.mxu0
        %v1382 = vadd.f32 %v1264, %v1381
        %v1383 = vpop.f32.mrf.mxu0
        %v1384 = vadd.f32 %v1264, %v1383
        %1385 = vmatmul.bf16.gmra.mxu0 %v1301
        %v1386 = vpop.f32.mrf.mxu0
        %v1387 = vadd.f32 %v1264, %v1386
        %v1388 = vpop.f32.mrf.mxu0
        %v1389 = vadd.f32 %v1264, %v1388
        %1390 = vmatmul.bf16.gmra.mxu0 %v1302
        %v1391 = vpop.f32.mrf.mxu0
        %v1392 = vadd.f32 %v1264, %v1391
        %v1393 = vpop.f32.mrf.mxu0
        %v1394 = vadd.f32 %v1264, %v1393
        %1395 = vmatmul.bf16.gmra.mxu0 %v1303
        %v1396 = vpop.f32.mrf.mxu0
        %v1397 = vadd.f32 %v1264, %v1396
        %v1398 = vpop.f32.mrf.mxu0
        %v1399 = vadd.f32 %v1264, %v1398
        %1400 = vmatmul.bf16.gmra.mxu0 %v1304
        %v1401 = vpop.f32.mrf.mxu0
        %v1402 = vadd.f32 %v1264, %v1401
        %v1403 = vpop.f32.mrf.mxu0
        %v1404 = vadd.f32 %v1264, %v1403
        %1405 = vmatmul.bf16.gmra.mxu0 %v1305
        %v1406 = vpop.f32.mrf.mxu0
        %v1407 = vadd.f32 %v1264, %v1406
        %v1408 = vpop.f32.mrf.mxu0
        %v1409 = vadd.f32 %v1264, %v1408
        %1410 = vdwg.mxu0
        %1411 = vmax.xlane.f32.xlu0 %v1372
        %v1412 = vpop.xlane.xlu0 %1411
        %1413 = vmax.xlane.f32.xlu0 %v1374
        %v1414 = vpop.xlane.xlu0 %1413
        %1415 = vmax.xlane.f32.xlu0 %v1377
        %v1416 = vpop.xlane.xlu0 %1415
        %1417 = vmax.xlane.f32.xlu0 %v1379
        %v1418 = vpop.xlane.xlu0 %1417
        %1419 = vmax.xlane.f32.xlu0 %v1382
        %v1420 = vpop.xlane.xlu0 %1419
        %1421 = vmax.xlane.f32.xlu0 %v1384
        %v1422 = vpop.xlane.xlu0 %1421
        %1423 = vmax.xlane.f32.xlu0 %v1387
        %v1424 = vpop.xlane.xlu0 %1423
        %1425 = vmax.xlane.f32.xlu0 %v1389
        %v1426 = vpop.xlane.xlu0 %1425
        %1427 = vmax.xlane.f32.xlu0 %v1392
        %v1428 = vpop.xlane.xlu0 %1427
        %1429 = vmax.xlane.f32.xlu0 %v1394
        %v1430 = vpop.xlane.xlu0 %1429
        %1431 = vmax.xlane.f32.xlu0 %v1397
        %v1432 = vpop.xlane.xlu0 %1431
        %1433 = vmax.xlane.f32.xlu0 %v1399
        %v1434 = vpop.xlane.xlu0 %1433
        %1435 = vmax.xlane.f32.xlu0 %v1402
        %v1436 = vpop.xlane.xlu0 %1435
        %1437 = vmax.xlane.f32.xlu0 %v1404
        %v1438 = vpop.xlane.xlu0 %1437
        %1439 = vmax.xlane.f32.xlu0 %v1407
        %v1440 = vpop.xlane.xlu0 %1439
        %1441 = vmax.xlane.f32.xlu0 %v1409
        %v1442 = vpop.xlane.xlu0 %1441
        %v1443 = vsub.f32 %v1372, %v1412
        %v1444 = vsub.f32 %v1374, %v1414
        %v1445 = vsub.f32 %v1377, %v1416
        %v1446 = vsub.f32 %v1379, %v1418
        %v1447 = vsub.f32 %v1382, %v1420
        %v1448 = vsub.f32 %v1384, %v1422
        %v1449 = vsub.f32 %v1387, %v1424
        %v1450 = vsub.f32 %v1389, %v1426
        %v1451 = vsub.f32 %v1392, %v1428
        %v1452 = vsub.f32 %v1394, %v1430
        %v1453 = vsub.f32 %v1397, %v1432
        %v1454 = vsub.f32 %v1399, %v1434
        %v1455 = vsub.f32 %v1402, %v1436
        %v1456 = vsub.f32 %v1404, %v1438
        %v1457 = vsub.f32 %v1407, %v1440
        %v1458 = vsub.f32 %v1409, %v1442
        %v1459 = vmul.f32 %v1443, 1.442695
        %v1460 = vpow.pop %v1459
        %v1461 = vmul.f32 %v1444, 1.442695
        %v1462 = vpow.pop %v1461
        %v1463 = vmul.f32 %v1445, 1.442695
        %v1464 = vpow.pop %v1463
        %v1465 = vmul.f32 %v1446, 1.442695
        %v1466 = vpow.pop %v1465
        %v1467 = vmul.f32 %v1447, 1.442695
        %v1468 = vpow.pop %v1467
        %v1469 = vmul.f32 %v1448, 1.442695
        %v1470 = vpow.pop %v1469
        %v1471 = vmul.f32 %v1449, 1.442695
        %v1472 = vpow.pop %v1471
        %v1473 = vmul.f32 %v1450, 1.442695
        %v1474 = vpow.pop %v1473
        %v1475 = vmul.f32 %v1451, 1.442695
        %v1476 = vpow.pop %v1475
        %v1477 = vmul.f32 %v1452, 1.442695
        %v1478 = vpow.pop %v1477
        %v1479 = vmul.f32 %v1453, 1.442695
        %v1480 = vpow.pop %v1479
        %v1481 = vmul.f32 %v1454, 1.442695
        %v1482 = vpow.pop %v1481
        %v1483 = vmul.f32 %v1455, 1.442695
        %v1484 = vpow.pop %v1483
        %v1485 = vmul.f32 %v1456, 1.442695
        %v1486 = vpow.pop %v1485
        %v1487 = vmul.f32 %v1457, 1.442695
        %v1488 = vpow.pop %v1487
        %v1489 = vmul.f32 %v1458, 1.442695
        %v1490 = vpow.pop %v1489
        %1491 = vadd.xlane.f32.xlu0 %v1460
        %v1492 = vpop.xlane.xlu0 %1491
        %1493 = vadd.xlane.f32.xlu0 %v1462
        %v1494 = vpop.xlane.xlu0 %1493
        %1495 = vadd.xlane.f32.xlu0 %v1464
        %v1496 = vpop.xlane.xlu0 %1495
        %1497 = vadd.xlane.f32.xlu0 %v1466
        %v1498 = vpop.xlane.xlu0 %1497
        %1499 = vadd.xlane.f32.xlu0 %v1468
        %v1500 = vpop.xlane.xlu0 %1499
        %1501 = vadd.xlane.f32.xlu0 %v1470
        %v1502 = vpop.xlane.xlu0 %1501
        %1503 = vadd.xlane.f32.xlu0 %v1472
        %v1504 = vpop.xlane.xlu0 %1503
        %1505 = vadd.xlane.f32.xlu0 %v1474
        %v1506 = vpop.xlane.xlu0 %1505
        %1507 = vadd.xlane.f32.xlu0 %v1476
        %v1508 = vpop.xlane.xlu0 %1507
        %1509 = vadd.xlane.f32.xlu0 %v1478
        %v1510 = vpop.xlane.xlu0 %1509
        %1511 = vadd.xlane.f32.xlu0 %v1480
        %v1512 = vpop.xlane.xlu0 %1511
        %1513 = vadd.xlane.f32.xlu0 %v1482
        %v1514 = vpop.xlane.xlu0 %1513
        %1515 = vadd.xlane.f32.xlu0 %v1484
        %v1516 = vpop.xlane.xlu0 %1515
        %1517 = vadd.xlane.f32.xlu0 %v1486
        %v1518 = vpop.xlane.xlu0 %1517
        %1519 = vadd.xlane.f32.xlu0 %v1488
        %v1520 = vpop.xlane.xlu0 %1519
        %1521 = vadd.xlane.f32.xlu0 %v1490
        %v1522 = vpop.xlane.xlu0 %1521
        %v1523 = vrcp.pop %v1492
        %v1524 = vrcp.pop %v1494
        %v1525 = vrcp.pop %v1496
        %v1526 = vrcp.pop %v1498
        %v1527 = vrcp.pop %v1500
        %v1528 = vrcp.pop %v1502
        %v1529 = vrcp.pop %v1504
        %v1530 = vrcp.pop %v1506
        %v1531 = vrcp.pop %v1508
        %v1532 = vrcp.pop %v1510
        %v1533 = vrcp.pop %v1512
        %v1534 = vrcp.pop %v1514
        %v1535 = vrcp.pop %v1516
        %v1536 = vrcp.pop %v1518
        %v1537 = vrcp.pop %v1520
        %v1538 = vrcp.pop %v1522
        %v1539 = vmul.f32 %v1460, %v1523
        %v1540 = vmul.f32 %v1462, %v1524
        %v1541 = vmul.f32 %v1464, %v1525
        %v1542 = vmul.f32 %v1466, %v1526
        %v1543 = vmul.f32 %v1468, %v1527
        %v1544 = vmul.f32 %v1470, %v1528
        %v1545 = vmul.f32 %v1472, %v1529
        %v1546 = vmul.f32 %v1474, %v1530
        %v1547 = vmul.f32 %v1476, %v1531
        %v1548 = vmul.f32 %v1478, %v1532
        %v1549 = vmul.f32 %v1480, %v1533
        %v1550 = vmul.f32 %v1482, %v1534
        %v1551 = vmul.f32 %v1484, %v1535
        %v1552 = vmul.f32 %v1486, %v1536
        %v1553 = vmul.f32 %v1488, %v1537
        %v1554 = vmul.f32 %v1490, %v1538
        %v1555 = vpack.c.bf16 %v1539, %v1539
        %v1556 = vpack.c.bf16 %v1540, %v1540
        %v1557 = vpack.c.bf16 %v1541, %v1541
        %v1558 = vpack.c.bf16 %v1542, %v1542
        %v1559 = vpack.c.bf16 %v1543, %v1543
        %v1560 = vpack.c.bf16 %v1544, %v1544
        %v1561 = vpack.c.bf16 %v1545, %v1545
        %v1562 = vpack.c.bf16 %v1546, %v1546
        %v1563 = vpack.c.bf16 %v1547, %v1547
        %v1564 = vpack.c.bf16 %v1548, %v1548
        %v1565 = vpack.c.bf16 %v1549, %v1549
        %v1566 = vpack.c.bf16 %v1550, %v1550
        %v1567 = vpack.c.bf16 %v1551, %v1551
        %v1568 = vpack.c.bf16 %v1552, %v1552
        %v1569 = vpack.c.bf16 %v1553, %v1553
        %v1570 = vpack.c.bf16 %v1554, %v1554
        %v1571 = vunpack.c.h.b16 %v831
        %v1572 = vunpack.c.h.b16 %v832
        %v1573 = vunpack.c.h.b16 %v833
        %v1574 = vunpack.c.h.b16 %v834
        %v1575 = vunpack.c.h.b16 %v835
        %v1576 = vunpack.c.h.b16 %v836
        %v1577 = vunpack.c.h.b16 %v837
        %v1578 = vunpack.c.h.b16 %v838
        %v1579 = vunpack.c.h.b16 %v839
        %v1580 = vunpack.c.h.b16 %v840
        %v1581 = vunpack.c.h.b16 %v841
        %v1582 = vunpack.c.h.b16 %v842
        %v1583 = vunpack.c.h.b16 %v843
        %v1584 = vunpack.c.h.b16 %v844
        %v1585 = vunpack.c.h.b16 %v845
        %v1586 = vunpack.c.h.b16 %v846
        %v1587 = vpack.c.b16 %v1572, %v1571
        %v1588 = vpack.c.b16 %v1574, %v1573
        %v1589 = vpack.c.b16 %v1576, %v1575
        %v1590 = vpack.c.b16 %v1578, %v1577
        %v1591 = vpack.c.b16 %v1580, %v1579
        %v1592 = vpack.c.b16 %v1582, %v1581
        %v1593 = vpack.c.b16 %v1584, %v1583
        %v1594 = vpack.c.b16 %v1586, %v1585
        %v1603 = vunpack.c.h.b16 %v1243
        %v1604 = vunpack.c.h.b16 %v1244
        %v1605 = vunpack.c.h.b16 %v1245
        %v1606 = vunpack.c.h.b16 %v1246
        %v1607 = vunpack.c.h.b16 %v1247
        %v1608 = vunpack.c.h.b16 %v1248
        %v1609 = vunpack.c.h.b16 %v1249
        %v1610 = vunpack.c.h.b16 %v1250
        %v1611 = vunpack.c.h.b16 %v1251
        %v1612 = vunpack.c.h.b16 %v1252
        %v1613 = vunpack.c.h.b16 %v1253
        %v1614 = vunpack.c.h.b16 %v1254
        %v1615 = vunpack.c.h.b16 %v1255
        %v1616 = vunpack.c.h.b16 %v1256
        %v1617 = vunpack.c.h.b16 %v1257
        %v1618 = vunpack.c.h.b16 %v1258
        %v1619 = vpack.c.b16 %v1604, %v1603
        %v1620 = vpack.c.b16 %v1606, %v1605
        %v1621 = vpack.c.b16 %v1608, %v1607
        %v1622 = vpack.c.b16 %v1610, %v1609
        %v1623 = vpack.c.b16 %v1612, %v1611
        %v1624 = vpack.c.b16 %v1614, %v1613
        %v1625 = vpack.c.b16 %v1616, %v1615
        %v1626 = vpack.c.b16 %v1618, %v1617
        %1635 = vmatpush.bf16.msra.mxu0 %v1626
        %1636 = vmatpush.bf16.msra.mxu0 %v1625
        %1637 = vmatpush.bf16.msra.mxu0 %v1624
        %1638 = vmatpush.bf16.msra.mxu0 %v1623
        %1639 = vmatpush.bf16.msra.mxu0 %v1622
        %1640 = vmatpush.bf16.msra.mxu0 %v1621
        %1641 = vmatpush.bf16.msra.mxu0 %v1620
        %1642 = vmatpush.bf16.msra.mxu0 %v1619
        %1643 = vmatmul.bf16.gmra.mxu0 %v1587
        %v1644 = vpop.f32.mrf.mxu0
        %v1645 = vadd.f32 %v1264, %v1644
        %v1646 = vpop.f32.mrf.mxu0
        %v1647 = vadd.f32 %v1264, %v1646
        %1648 = vmatmul.bf16.gmra.mxu0 %v1588
        %v1649 = vpop.f32.mrf.mxu0
        %v1650 = vadd.f32 %v1264, %v1649
        %v1651 = vpop.f32.mrf.mxu0
        %v1652 = vadd.f32 %v1264, %v1651
        %1653 = vmatmul.bf16.gmra.mxu0 %v1589
        %v1654 = vpop.f32.mrf.mxu0
        %v1655 = vadd.f32 %v1264, %v1654
        %v1656 = vpop.f32.mrf.mxu0
        %v1657 = vadd.f32 %v1264, %v1656
        %1658 = vmatmul.bf16.gmra.mxu0 %v1590
        %v1659 = vpop.f32.mrf.mxu0
        %v1660 = vadd.f32 %v1264, %v1659
        %v1661 = vpop.f32.mrf.mxu0
        %v1662 = vadd.f32 %v1264, %v1661
        %1663 = vmatmul.bf16.gmra.mxu0 %v1591
        %v1664 = vpop.f32.mrf.mxu0
        %v1665 = vadd.f32 %v1264, %v1664
        %v1666 = vpop.f32.mrf.mxu0
        %v1667 = vadd.f32 %v1264, %v1666
        %1668 = vmatmul.bf16.gmra.mxu0 %v1592
        %v1669 = vpop.f32.mrf.mxu0
        %v1670 = vadd.f32 %v1264, %v1669
        %v1671 = vpop.f32.mrf.mxu0
        %v1672 = vadd.f32 %v1264, %v1671
        %1673 = vmatmul.bf16.gmra.mxu0 %v1593
        %v1674 = vpop.f32.mrf.mxu0
        %v1675 = vadd.f32 %v1264, %v1674
        %v1676 = vpop.f32.mrf.mxu0
        %v1677 = vadd.f32 %v1264, %v1676
        %1678 = vmatmul.bf16.gmra.mxu0 %v1594
        %v1679 = vpop.f32.mrf.mxu0
        %v1680 = vadd.f32 %v1264, %v1679
        %v1681 = vpop.f32.mrf.mxu0
        %v1682 = vadd.f32 %v1264, %v1681
        %1683 = vdwg.mxu0
        %1684 = vmax.xlane.f32.xlu0 %v1645
        %v1685 = vpop.xlane.xlu0 %1684
        %1686 = vmax.xlane.f32.xlu0 %v1647
        %v1687 = vpop.xlane.xlu0 %1686
        %1688 = vmax.xlane.f32.xlu0 %v1650
        %v1689 = vpop.xlane.xlu0 %1688
        %1690 = vmax.xlane.f32.xlu0 %v1652
        %v1691 = vpop.xlane.xlu0 %1690
        %1692 = vmax.xlane.f32.xlu0 %v1655
        %v1693 = vpop.xlane.xlu0 %1692
        %1694 = vmax.xlane.f32.xlu0 %v1657
        %v1695 = vpop.xlane.xlu0 %1694
        %1696 = vmax.xlane.f32.xlu0 %v1660
        %v1697 = vpop.xlane.xlu0 %1696
        %1698 = vmax.xlane.f32.xlu0 %v1662
        %v1699 = vpop.xlane.xlu0 %1698
        %1700 = vmax.xlane.f32.xlu0 %v1665
        %v1701 = vpop.xlane.xlu0 %1700
        %1702 = vmax.xlane.f32.xlu0 %v1667
        %v1703 = vpop.xlane.xlu0 %1702
        %1704 = vmax.xlane.f32.xlu0 %v1670
        %v1705 = vpop.xlane.xlu0 %1704
        %1706 = vmax.xlane.f32.xlu0 %v1672
        %v1707 = vpop.xlane.xlu0 %1706
        %1708 = vmax.xlane.f32.xlu0 %v1675
        %v1709 = vpop.xlane.xlu0 %1708
        %1710 = vmax.xlane.f32.xlu0 %v1677
        %v1711 = vpop.xlane.xlu0 %1710
        %1712 = vmax.xlane.f32.xlu0 %v1680
        %v1713 = vpop.xlane.xlu0 %1712
        %1714 = vmax.xlane.f32.xlu0 %v1682
        %v1715 = vpop.xlane.xlu0 %1714
        %v1716 = vsub.f32 %v1645, %v1685
        %v1717 = vsub.f32 %v1647, %v1687
        %v1718 = vsub.f32 %v1650, %v1689
        %v1719 = vsub.f32 %v1652, %v1691
        %v1720 = vsub.f32 %v1655, %v1693
        %v1721 = vsub.f32 %v1657, %v1695
        %v1722 = vsub.f32 %v1660, %v1697
        %v1723 = vsub.f32 %v1662, %v1699
        %v1724 = vsub.f32 %v1665, %v1701
        %v1725 = vsub.f32 %v1667, %v1703
        %v1726 = vsub.f32 %v1670, %v1705
        %v1727 = vsub.f32 %v1672, %v1707
        %v1728 = vsub.f32 %v1675, %v1709
        %v1729 = vsub.f32 %v1677, %v1711
        %v1730 = vsub.f32 %v1680, %v1713
        %v1731 = vsub.f32 %v1682, %v1715
        %v1732 = vmul.f32 %v1716, 1.442695
        %v1733 = vpow.pop %v1732
        %v1734 = vmul.f32 %v1717, 1.442695
        %v1735 = vpow.pop %v1734
        %v1736 = vmul.f32 %v1718, 1.442695
        %v1737 = vpow.pop %v1736
        %v1738 = vmul.f32 %v1719, 1.442695
        %v1739 = vpow.pop %v1738
        %v1740 = vmul.f32 %v1720, 1.442695
        %v1741 = vpow.pop %v1740
        %v1742 = vmul.f32 %v1721, 1.442695
        %v1743 = vpow.pop %v1742
        %v1744 = vmul.f32 %v1722, 1.442695
        %v1745 = vpow.pop %v1744
        %v1746 = vmul.f32 %v1723, 1.442695
        %v1747 = vpow.pop %v1746
        %v1748 = vmul.f32 %v1724, 1.442695
        %v1749 = vpow.pop %v1748
        %v1750 = vmul.f32 %v1725, 1.442695
        %v1751 = vpow.pop %v1750
        %v1752 = vmul.f32 %v1726, 1.442695
        %v1753 = vpow.pop %v1752
        %v1754 = vmul.f32 %v1727, 1.442695
        %v1755 = vpow.pop %v1754
        %v1756 = vmul.f32 %v1728, 1.442695
        %v1757 = vpow.pop %v1756
        %v1758 = vmul.f32 %v1729, 1.442695
        %v1759 = vpow.pop %v1758
        %v1760 = vmul.f32 %v1730, 1.442695
        %v1761 = vpow.pop %v1760
        %v1762 = vmul.f32 %v1731, 1.442695
        %v1763 = vpow.pop %v1762
        %1764 = vadd.xlane.f32.xlu0 %v1733
        %v1765 = vpop.xlane.xlu0 %1764
        %1766 = vadd.xlane.f32.xlu0 %v1735
        %v1767 = vpop.xlane.xlu0 %1766
        %1768 = vadd.xlane.f32.xlu0 %v1737
        %v1769 = vpop.xlane.xlu0 %1768
        %1770 = vadd.xlane.f32.xlu0 %v1739
        %v1771 = vpop.xlane.xlu0 %1770
        %1772 = vadd.xlane.f32.xlu0 %v1741
        %v1773 = vpop.xlane.xlu0 %1772
        %1774 = vadd.xlane.f32.xlu0 %v1743
        %v1775 = vpop.xlane.xlu0 %1774
        %1776 = vadd.xlane.f32.xlu0 %v1745
        %v1777 = vpop.xlane.xlu0 %1776
        %1778 = vadd.xlane.f32.xlu0 %v1747
        %v1779 = vpop.xlane.xlu0 %1778
        %1780 = vadd.xlane.f32.xlu0 %v1749
        %v1781 = vpop.xlane.xlu0 %1780
        %1782 = vadd.xlane.f32.xlu0 %v1751
        %v1783 = vpop.xlane.xlu0 %1782
        %1784 = vadd.xlane.f32.xlu0 %v1753
        %v1785 = vpop.xlane.xlu0 %1784
        %1786 = vadd.xlane.f32.xlu0 %v1755
        %v1787 = vpop.xlane.xlu0 %1786
        %1788 = vadd.xlane.f32.xlu0 %v1757
        %v1789 = vpop.xlane.xlu0 %1788
        %1790 = vadd.xlane.f32.xlu0 %v1759
        %v1791 = vpop.xlane.xlu0 %1790
        %1792 = vadd.xlane.f32.xlu0 %v1761
        %v1793 = vpop.xlane.xlu0 %1792
        %1794 = vadd.xlane.f32.xlu0 %v1763
        %v1795 = vpop.xlane.xlu0 %1794
        %v1796 = vrcp.pop %v1765
        %v1797 = vrcp.pop %v1767
        %v1798 = vrcp.pop %v1769
        %v1799 = vrcp.pop %v1771
        %v1800 = vrcp.pop %v1773
        %v1801 = vrcp.pop %v1775
        %v1802 = vrcp.pop %v1777
        %v1803 = vrcp.pop %v1779
        %v1804 = vrcp.pop %v1781
        %v1805 = vrcp.pop %v1783
        %v1806 = vrcp.pop %v1785
        %v1807 = vrcp.pop %v1787
        %v1808 = vrcp.pop %v1789
        %v1809 = vrcp.pop %v1791
        %v1810 = vrcp.pop %v1793
        %v1811 = vrcp.pop %v1795
        %v1812 = vmul.f32 %v1733, %v1796
        %v1813 = vmul.f32 %v1735, %v1797
        %v1814 = vmul.f32 %v1737, %v1798
        %v1815 = vmul.f32 %v1739, %v1799
        %v1816 = vmul.f32 %v1741, %v1800
        %v1817 = vmul.f32 %v1743, %v1801
        %v1818 = vmul.f32 %v1745, %v1802
        %v1819 = vmul.f32 %v1747, %v1803
        %v1820 = vmul.f32 %v1749, %v1804
        %v1821 = vmul.f32 %v1751, %v1805
        %v1822 = vmul.f32 %v1753, %v1806
        %v1823 = vmul.f32 %v1755, %v1807
        %v1824 = vmul.f32 %v1757, %v1808
        %v1825 = vmul.f32 %v1759, %v1809
        %v1826 = vmul.f32 %v1761, %v1810
        %v1827 = vmul.f32 %v1763, %v1811
        %v1828 = vpack.c.bf16 %v1812, %v1812
        %v1829 = vpack.c.bf16 %v1813, %v1813
        %v1830 = vpack.c.bf16 %v1814, %v1814
        %v1831 = vpack.c.bf16 %v1815, %v1815
        %v1832 = vpack.c.bf16 %v1816, %v1816
        %v1833 = vpack.c.bf16 %v1817, %v1817
        %v1834 = vpack.c.bf16 %v1818, %v1818
        %v1835 = vpack.c.bf16 %v1819, %v1819
        %v1836 = vpack.c.bf16 %v1820, %v1820
        %v1837 = vpack.c.bf16 %v1821, %v1821
        %v1838 = vpack.c.bf16 %v1822, %v1822
        %v1839 = vpack.c.bf16 %v1823, %v1823
        %v1840 = vpack.c.bf16 %v1824, %v1824
        %v1841 = vpack.c.bf16 %v1825, %v1825
        %v1842 = vpack.c.bf16 %v1826, %v1826
        %v1843 = vpack.c.bf16 %v1827, %v1827
        %v1860 = vunpack.c.l.b16 %v1555
        %v1861 = vunpack.c.l.b16 %v1556
        %v1862 = vunpack.c.l.b16 %v1557
        %v1863 = vunpack.c.l.b16 %v1558
        %v1864 = vunpack.c.l.b16 %v1559
        %v1865 = vunpack.c.l.b16 %v1560
        %v1866 = vunpack.c.l.b16 %v1561
        %v1867 = vunpack.c.l.b16 %v1562
        %v1868 = vunpack.c.l.b16 %v1563
        %v1869 = vunpack.c.l.b16 %v1564
        %v1870 = vunpack.c.l.b16 %v1565
        %v1871 = vunpack.c.l.b16 %v1566
        %v1872 = vunpack.c.l.b16 %v1567
        %v1873 = vunpack.c.l.b16 %v1568
        %v1874 = vunpack.c.l.b16 %v1569
        %v1875 = vunpack.c.l.b16 %v1570
        %v1876 = vpack.c.b16 %v1861, %v1860
        %v1877 = vpack.c.b16 %v1863, %v1862
        %v1878 = vpack.c.b16 %v1865, %v1864
        %v1879 = vpack.c.b16 %v1867, %v1866
        %v1880 = vpack.c.b16 %v1869, %v1868
        %v1881 = vpack.c.b16 %v1871, %v1870
        %v1882 = vpack.c.b16 %v1873, %v1872
        %v1883 = vpack.c.b16 %v1875, %v1874
        %v1908 = vunpack.c.l.b16 %v1828
        %v1909 = vunpack.c.l.b16 %v1829
        %v1910 = vunpack.c.l.b16 %v1830
        %v1911 = vunpack.c.l.b16 %v1831
        %v1912 = vunpack.c.l.b16 %v1832
        %v1913 = vunpack.c.l.b16 %v1833
        %v1914 = vunpack.c.l.b16 %v1834
        %v1915 = vunpack.c.l.b16 %v1835
        %v1916 = vunpack.c.l.b16 %v1836
        %v1917 = vunpack.c.l.b16 %v1837
        %v1918 = vunpack.c.l.b16 %v1838
        %v1919 = vunpack.c.l.b16 %v1839
        %v1920 = vunpack.c.l.b16 %v1840
        %v1921 = vunpack.c.l.b16 %v1841
        %v1922 = vunpack.c.l.b16 %v1842
        %v1923 = vunpack.c.l.b16 %v1843
        %v1924 = vpack.c.b16 %v1909, %v1908
        %v1925 = vpack.c.b16 %v1911, %v1910
        %v1926 = vpack.c.b16 %v1913, %v1912
        %v1927 = vpack.c.b16 %v1915, %v1914
        %v1928 = vpack.c.b16 %v1917, %v1916
        %v1929 = vpack.c.b16 %v1919, %v1918
        %v1930 = vpack.c.b16 %v1921, %v1920
        %v1931 = vpack.c.b16 %v1923, %v1922
        %s1940 = scalar_lea.vmem [#allocation8], 512
        %v1941 = vld [vmem:[%s1940] sm:$0xff]
        %v1942 = vld [vmem:[%s1940 + $0x8] sm:$0xff]
        %v1943 = vld [vmem:[%s1940 + $0x10] sm:$0xff]
        %v1944 = vld [vmem:[%s1940 + $0x18] sm:$0xff]
        %v1945 = vld [vmem:[%s1940 + $0x20] sm:$0xff]
        %v1946 = vld [vmem:[%s1940 + $0x28] sm:$0xff]
        %v1947 = vld [vmem:[%s1940 + $0x30] sm:$0xff]
        %v1948 = vld [vmem:[%s1940 + $0x38] sm:$0xff]
        %v1949 = vld [vmem:[%s1940 + $0x40] sm:$0xff]
        %v1950 = vld [vmem:[%s1940 + $0x48] sm:$0xff]
        %v1951 = vld [vmem:[%s1940 + $0x50] sm:$0xff]
        %v1952 = vld [vmem:[%s1940 + $0x58] sm:$0xff]
        %v1953 = vld [vmem:[%s1940 + $0x60] sm:$0xff]
        %v1954 = vld [vmem:[%s1940 + $0x68] sm:$0xff]
        %v1955 = vld [vmem:[%s1940 + $0x70] sm:$0xff]
        %v1956 = vld [vmem:[%s1940 + $0x78] sm:$0xff]
        %v1957 = vld [vmem:[%s1940 + $0x80] sm:$0xff]
        %v1958 = vld [vmem:[%s1940 + $0x88] sm:$0xff]
        %v1959 = vld [vmem:[%s1940 + $0x90] sm:$0xff]
        %v1960 = vld [vmem:[%s1940 + $0x98] sm:$0xff]
        %v1961 = vld [vmem:[%s1940 + $0xa0] sm:$0xff]
        %v1962 = vld [vmem:[%s1940 + $0xa8] sm:$0xff]
        %v1963 = vld [vmem:[%s1940 + $0xb0] sm:$0xff]
        %v1964 = vld [vmem:[%s1940 + $0xb8] sm:$0xff]
        %v1965 = vld [vmem:[%s1940 + $0xc0] sm:$0xff]
        %v1966 = vld [vmem:[%s1940 + $0xc8] sm:$0xff]
        %v1967 = vld [vmem:[%s1940 + $0xd0] sm:$0xff]
        %v1968 = vld [vmem:[%s1940 + $0xd8] sm:$0xff]
        %v1969 = vld [vmem:[%s1940 + $0xe0] sm:$0xff]
        %v1970 = vld [vmem:[%s1940 + $0xe8] sm:$0xff]
        %v1971 = vld [vmem:[%s1940 + $0xf0] sm:$0xff]
        %v1972 = vld [vmem:[%s1940 + $0xf8] sm:$0xff]
        %s1973 = scalar_lea.vmem %s4, 4
        %v1974 = vld [vmem:[%s1973] sm:$0x3]
        %v1976 = vperm.slane %v1974, 0
        %v1977 = vperm.slane %v1974, 1
        %v2012 = vunpack.c.l.b16 %v1941
        %v2013 = vunpack.c.h.b16 %v1941
        %v2014 = vunpack.c.l.b16 %v1942
        %v2015 = vunpack.c.h.b16 %v1942
        %v2016 = vunpack.c.l.b16 %v1943
        %v2017 = vunpack.c.h.b16 %v1943
        %v2018 = vunpack.c.l.b16 %v1944
        %v2019 = vunpack.c.h.b16 %v1944
        %v2020 = vunpack.c.l.b16 %v1945
        %v2021 = vunpack.c.h.b16 %v1945
        %v2022 = vunpack.c.l.b16 %v1946
        %v2023 = vunpack.c.h.b16 %v1946
        %v2024 = vunpack.c.l.b16 %v1947
        %v2025 = vunpack.c.h.b16 %v1947
        %v2026 = vunpack.c.l.b16 %v1948
        %v2027 = vunpack.c.h.b16 %v1948
        %v2028 = vunpack.c.l.b16 %v1949
        %v2029 = vunpack.c.h.b16 %v1949
        %v2030 = vunpack.c.l.b16 %v1950
        %v2031 = vunpack.c.h.b16 %v1950
        %v2032 = vunpack.c.l.b16 %v1951
        %v2033 = vunpack.c.h.b16 %v1951
        %v2034 = vunpack.c.l.b16 %v1952
        %v2035 = vunpack.c.h.b16 %v1952
        %v2036 = vunpack.c.l.b16 %v1953
        %v2037 = vunpack.c.h.b16 %v1953
        %v2038 = vunpack.c.l.b16 %v1954
        %v2039 = vunpack.c.h.b16 %v1954
        %v2040 = vunpack.c.l.b16 %v1955
        %v2041 = vunpack.c.h.b16 %v1955
        %v2042 = vunpack.c.l.b16 %v1956
        %v2043 = vunpack.c.h.b16 %v1956
        %v2044 = vunpack.c.l.b16 %v1957
        %v2045 = vunpack.c.h.b16 %v1957
        %v2046 = vunpack.c.l.b16 %v1958
        %v2047 = vunpack.c.h.b16 %v1958
        %v2048 = vunpack.c.l.b16 %v1959
        %v2049 = vunpack.c.h.b16 %v1959
        %v2050 = vunpack.c.l.b16 %v1960
        %v2051 = vunpack.c.h.b16 %v1960
        %v2052 = vunpack.c.l.b16 %v1961
        %v2053 = vunpack.c.h.b16 %v1961
        %v2054 = vunpack.c.l.b16 %v1962
        %v2055 = vunpack.c.h.b16 %v1962
        %v2056 = vunpack.c.l.b16 %v1963
        %v2057 = vunpack.c.h.b16 %v1963
        %v2058 = vunpack.c.l.b16 %v1964
        %v2059 = vunpack.c.h.b16 %v1964
        %v2060 = vunpack.c.l.b16 %v1965
        %v2061 = vunpack.c.h.b16 %v1965
        %v2062 = vunpack.c.l.b16 %v1966
        %v2063 = vunpack.c.h.b16 %v1966
        %v2064 = vunpack.c.l.b16 %v1967
        %v2065 = vunpack.c.h.b16 %v1967
        %v2066 = vunpack.c.l.b16 %v1968
        %v2067 = vunpack.c.h.b16 %v1968
        %v2068 = vunpack.c.l.b16 %v1969
        %v2069 = vunpack.c.h.b16 %v1969
        %v2070 = vunpack.c.l.b16 %v1970
        %v2071 = vunpack.c.h.b16 %v1970
        %v2072 = vunpack.c.l.b16 %v1971
        %v2073 = vunpack.c.h.b16 %v1971
        %v2074 = vunpack.c.l.b16 %v1972
        %v2075 = vunpack.c.h.b16 %v1972
        %v2076 = vpack.c.b16 %v2014, %v2012
        %v2077 = vpack.c.b16 %v2015, %v2013
        %v2078 = vpack.c.b16 %v2018, %v2016
        %v2079 = vpack.c.b16 %v2019, %v2017
        %v2080 = vpack.c.b16 %v2022, %v2020
        %v2081 = vpack.c.b16 %v2023, %v2021
        %v2082 = vpack.c.b16 %v2026, %v2024
        %v2083 = vpack.c.b16 %v2027, %v2025
        %v2084 = vpack.c.b16 %v2030, %v2028
        %v2085 = vpack.c.b16 %v2031, %v2029
        %v2086 = vpack.c.b16 %v2034, %v2032
        %v2087 = vpack.c.b16 %v2035, %v2033
        %v2088 = vpack.c.b16 %v2038, %v2036
        %v2089 = vpack.c.b16 %v2039, %v2037
        %v2090 = vpack.c.b16 %v2042, %v2040
        %v2091 = vpack.c.b16 %v2043, %v2041
        %v2092 = vpack.c.b16 %v2046, %v2044
        %v2093 = vpack.c.b16 %v2047, %v2045
        %v2094 = vpack.c.b16 %v2050, %v2048
        %v2095 = vpack.c.b16 %v2051, %v2049
        %v2096 = vpack.c.b16 %v2054, %v2052
        %v2097 = vpack.c.b16 %v2055, %v2053
        %v2098 = vpack.c.b16 %v2058, %v2056
        %v2099 = vpack.c.b16 %v2059, %v2057
        %v2100 = vpack.c.b16 %v2062, %v2060
        %v2101 = vpack.c.b16 %v2063, %v2061
        %v2102 = vpack.c.b16 %v2066, %v2064
        %v2103 = vpack.c.b16 %v2067, %v2065
        %v2104 = vpack.c.b16 %v2070, %v2068
        %v2105 = vpack.c.b16 %v2071, %v2069
        %v2106 = vpack.c.b16 %v2074, %v2072
        %v2107 = vpack.c.b16 %v2075, %v2073
        %2140 = vmatpush.bf16.msra.mxu0 %v2090
        %2141 = vmatpush.bf16.msra.mxu0 %v2088
        %2142 = vmatpush.bf16.msra.mxu0 %v2086
        %2143 = vmatpush.bf16.msra.mxu0 %v2084
        %2144 = vmatpush.bf16.msra.mxu0 %v2082
        %2145 = vmatpush.bf16.msra.mxu0 %v2080
        %2146 = vmatpush.bf16.msra.mxu0 %v2078
        %2147 = vmatpush.bf16.msra.mxu0 %v2076
        %2148 = vmatmul.bf16.gmra.mxu0 %v1876
        %v2149 = vpop.f32.mrf.mxu0
        %v2150 = vadd.f32 %v1976, %v2149
        %v2151 = vpop.f32.mrf.mxu0
        %v2152 = vadd.f32 %v1976, %v2151
        %2153 = vmatmul.bf16.gmra.mxu0 %v1877
        %v2154 = vpop.f32.mrf.mxu0
        %v2155 = vadd.f32 %v1976, %v2154
        %v2156 = vpop.f32.mrf.mxu0
        %v2157 = vadd.f32 %v1976, %v2156
        %2158 = vmatmul.bf16.gmra.mxu0 %v1878
        %v2159 = vpop.f32.mrf.mxu0
        %v2160 = vadd.f32 %v1976, %v2159
        %v2161 = vpop.f32.mrf.mxu0
        %v2162 = vadd.f32 %v1976, %v2161
        %2163 = vmatmul.bf16.gmra.mxu0 %v1879
        %v2164 = vpop.f32.mrf.mxu0
        %v2165 = vadd.f32 %v1976, %v2164
        %v2166 = vpop.f32.mrf.mxu0
        %v2167 = vadd.f32 %v1976, %v2166
        %2168 = vmatmul.bf16.gmra.mxu0 %v1880
        %v2169 = vpop.f32.mrf.mxu0
        %v2170 = vadd.f32 %v1976, %v2169
        %v2171 = vpop.f32.mrf.mxu0
        %v2172 = vadd.f32 %v1976, %v2171
        %2173 = vmatmul.bf16.gmra.mxu0 %v1881
        %v2174 = vpop.f32.mrf.mxu0
        %v2175 = vadd.f32 %v1976, %v2174
        %v2176 = vpop.f32.mrf.mxu0
        %v2177 = vadd.f32 %v1976, %v2176
        %2178 = vmatmul.bf16.gmra.mxu0 %v1882
        %v2179 = vpop.f32.mrf.mxu0
        %v2180 = vadd.f32 %v1976, %v2179
        %v2181 = vpop.f32.mrf.mxu0
        %v2182 = vadd.f32 %v1976, %v2181
        %2183 = vmatmul.bf16.gmra.mxu0 %v1883
        %v2184 = vpop.f32.mrf.mxu0
        %v2185 = vadd.f32 %v1976, %v2184
        %v2186 = vpop.f32.mrf.mxu0
        %v2187 = vadd.f32 %v1976, %v2186
        %2188 = vdwg.mxu0
        %2189 = vmatpush.bf16.msra.mxu0 %v2106
        %2190 = vmatpush.bf16.msra.mxu0 %v2104
        %2191 = vmatpush.bf16.msra.mxu0 %v2102
        %2192 = vmatpush.bf16.msra.mxu0 %v2100
        %2193 = vmatpush.bf16.msra.mxu0 %v2098
        %2194 = vmatpush.bf16.msra.mxu0 %v2096
        %2195 = vmatpush.bf16.msra.mxu0 %v2094
        %2196 = vmatpush.bf16.msra.mxu0 %v2092
        %2197 = vmatmul.bf16.gmra.mxu0 %v1924
        %v2198 = vpop.f32.mrf.mxu0
        %v2199 = vadd.f32 %v2150, %v2198
        %v2200 = vpop.f32.mrf.mxu0
        %v2201 = vadd.f32 %v2152, %v2200
        %2202 = vmatmul.bf16.gmra.mxu0 %v1925
        %v2203 = vpop.f32.mrf.mxu0
        %v2204 = vadd.f32 %v2155, %v2203
        %v2205 = vpop.f32.mrf.mxu0
        %v2206 = vadd.f32 %v2157, %v2205
        %2207 = vmatmul.bf16.gmra.mxu0 %v1926
        %v2208 = vpop.f32.mrf.mxu0
        %v2209 = vadd.f32 %v2160, %v2208
        %v2210 = vpop.f32.mrf.mxu0
        %v2211 = vadd.f32 %v2162, %v2210
        %2212 = vmatmul.bf16.gmra.mxu0 %v1927
        %v2213 = vpop.f32.mrf.mxu0
        %v2214 = vadd.f32 %v2165, %v2213
        %v2215 = vpop.f32.mrf.mxu0
        %v2216 = vadd.f32 %v2167, %v2215
        %2217 = vmatmul.bf16.gmra.mxu0 %v1928
        %v2218 = vpop.f32.mrf.mxu0
        %v2219 = vadd.f32 %v2170, %v2218
        %v2220 = vpop.f32.mrf.mxu0
        %v2221 = vadd.f32 %v2172, %v2220
        %2222 = vmatmul.bf16.gmra.mxu0 %v1929
        %v2223 = vpop.f32.mrf.mxu0
        %v2224 = vadd.f32 %v2175, %v2223
        %v2225 = vpop.f32.mrf.mxu0
        %v2226 = vadd.f32 %v2177, %v2225
        %2227 = vmatmul.bf16.gmra.mxu0 %v1930
        %v2228 = vpop.f32.mrf.mxu0
        %v2229 = vadd.f32 %v2180, %v2228
        %v2230 = vpop.f32.mrf.mxu0
        %v2231 = vadd.f32 %v2182, %v2230
        %2232 = vmatmul.bf16.gmra.mxu0 %v1931
        %v2233 = vpop.f32.mrf.mxu0
        %v2234 = vadd.f32 %v2185, %v2233
        %v2235 = vpop.f32.mrf.mxu0
        %v2236 = vadd.f32 %v2187, %v2235
        %2237 = vdwg.mxu0
        %2238 = vmatpush.bf16.msra.mxu0 %v2091
        %2239 = vmatpush.bf16.msra.mxu0 %v2089
        %2240 = vmatpush.bf16.msra.mxu0 %v2087
        %2241 = vmatpush.bf16.msra.mxu0 %v2085
        %2242 = vmatpush.bf16.msra.mxu0 %v2083
        %2243 = vmatpush.bf16.msra.mxu0 %v2081
        %2244 = vmatpush.bf16.msra.mxu0 %v2079
        %2245 = vmatpush.bf16.msra.mxu0 %v2077
        %2246 = vmatmul.bf16.gmra.mxu0 %v1876
        %v2247 = vpop.f32.mrf.mxu0
        %v2248 = vadd.f32 %v1977, %v2247
        %v2249 = vpop.f32.mrf.mxu0
        %v2250 = vadd.f32 %v1977, %v2249
        %2251 = vmatmul.bf16.gmra.mxu0 %v1877
        %v2252 = vpop.f32.mrf.mxu0
        %v2253 = vadd.f32 %v1977, %v2252
        %v2254 = vpop.f32.mrf.mxu0
        %v2255 = vadd.f32 %v1977, %v2254
        %2256 = vmatmul.bf16.gmra.mxu0 %v1878
        %v2257 = vpop.f32.mrf.mxu0
        %v2258 = vadd.f32 %v1977, %v2257
        %v2259 = vpop.f32.mrf.mxu0
        %v2260 = vadd.f32 %v1977, %v2259
        %2261 = vmatmul.bf16.gmra.mxu0 %v1879
        %v2262 = vpop.f32.mrf.mxu0
        %v2263 = vadd.f32 %v1977, %v2262
        %v2264 = vpop.f32.mrf.mxu0
        %v2265 = vadd.f32 %v1977, %v2264
        %2266 = vmatmul.bf16.gmra.mxu0 %v1880
        %v2267 = vpop.f32.mrf.mxu0
        %v2268 = vadd.f32 %v1977, %v2267
        %v2269 = vpop.f32.mrf.mxu0
        %v2270 = vadd.f32 %v1977, %v2269
        %2271 = vmatmul.bf16.gmra.mxu0 %v1881
        %v2272 = vpop.f32.mrf.mxu0
        %v2273 = vadd.f32 %v1977, %v2272
        %v2274 = vpop.f32.mrf.mxu0
        %v2275 = vadd.f32 %v1977, %v2274
        %2276 = vmatmul.bf16.gmra.mxu0 %v1882
        %v2277 = vpop.f32.mrf.mxu0
        %v2278 = vadd.f32 %v1977, %v2277
        %v2279 = vpop.f32.mrf.mxu0
        %v2280 = vadd.f32 %v1977, %v2279
        %2281 = vmatmul.bf16.gmra.mxu0 %v1883
        %v2282 = vpop.f32.mrf.mxu0
        %v2283 = vadd.f32 %v1977, %v2282
        %v2284 = vpop.f32.mrf.mxu0
        %v2285 = vadd.f32 %v1977, %v2284
        %2286 = vdwg.mxu0
        %2287 = vmatpush.bf16.msra.mxu0 %v2107
        %2288 = vmatpush.bf16.msra.mxu0 %v2105
        %2289 = vmatpush.bf16.msra.mxu0 %v2103
        %2290 = vmatpush.bf16.msra.mxu0 %v2101
        %2291 = vmatpush.bf16.msra.mxu0 %v2099
        %2292 = vmatpush.bf16.msra.mxu0 %v2097
        %2293 = vmatpush.bf16.msra.mxu0 %v2095
        %2294 = vmatpush.bf16.msra.mxu0 %v2093
        %2295 = vmatmul.bf16.gmra.mxu0 %v1924
        %v2296 = vpop.f32.mrf.mxu0
        %v2297 = vadd.f32 %v2248, %v2296
        %v2298 = vpop.f32.mrf.mxu0
        %v2299 = vadd.f32 %v2250, %v2298
        %2300 = vmatmul.bf16.gmra.mxu0 %v1925
        %v2301 = vpop.f32.mrf.mxu0
        %v2302 = vadd.f32 %v2253, %v2301
        %v2303 = vpop.f32.mrf.mxu0
        %v2304 = vadd.f32 %v2255, %v2303
        %2305 = vmatmul.bf16.gmra.mxu0 %v1926
        %v2306 = vpop.f32.mrf.mxu0
        %v2307 = vadd.f32 %v2258, %v2306
        %v2308 = vpop.f32.mrf.mxu0
        %v2309 = vadd.f32 %v2260, %v2308
        %2310 = vmatmul.bf16.gmra.mxu0 %v1927
        %v2311 = vpop.f32.mrf.mxu0
        %v2312 = vadd.f32 %v2263, %v2311
        %v2313 = vpop.f32.mrf.mxu0
        %v2314 = vadd.f32 %v2265, %v2313
        %2315 = vmatmul.bf16.gmra.mxu0 %v1928
        %v2316 = vpop.f32.mrf.mxu0
        %v2317 = vadd.f32 %v2268, %v2316
        %v2318 = vpop.f32.mrf.mxu0
        %v2319 = vadd.f32 %v2270, %v2318
        %2320 = vmatmul.bf16.gmra.mxu0 %v1929
        %v2321 = vpop.f32.mrf.mxu0
        %v2322 = vadd.f32 %v2273, %v2321
        %v2323 = vpop.f32.mrf.mxu0
        %v2324 = vadd.f32 %v2275, %v2323
        %2325 = vmatmul.bf16.gmra.mxu0 %v1930
        %v2326 = vpop.f32.mrf.mxu0
        %v2327 = vadd.f32 %v2278, %v2326
        %v2328 = vpop.f32.mrf.mxu0
        %v2329 = vadd.f32 %v2280, %v2328
        %2330 = vmatmul.bf16.gmra.mxu0 %v1931
        %v2331 = vpop.f32.mrf.mxu0
        %v2332 = vadd.f32 %v2283, %v2331
        %v2333 = vpop.f32.mrf.mxu0
        %v2334 = vadd.f32 %v2285, %v2333
        %2335 = vdwg.mxu0
        %2336 = vst [vmem:[%s337] sm:$0xff] %v2199
        %2337 = vst [vmem:[%s337 + $0x8] sm:$0xff] %v2297
        %2338 = vst [vmem:[%s337 + $0x10] sm:$0xff] %v2201
        %2339 = vst [vmem:[%s337 + $0x18] sm:$0xff] %v2299
        %2340 = vst [vmem:[%s337 + $0x20] sm:$0xff] %v2204
        %2341 = vst [vmem:[%s337 + $0x28] sm:$0xff] %v2302
        %2342 = vst [vmem:[%s337 + $0x30] sm:$0xff] %v2206
        %2343 = vst [vmem:[%s337 + $0x38] sm:$0xff] %v2304
        %2344 = vst [vmem:[%s337 + $0x40] sm:$0xff] %v2209
        %2345 = vst [vmem:[%s337 + $0x48] sm:$0xff] %v2307
        %2346 = vst [vmem:[%s337 + $0x50] sm:$0xff] %v2211
        %2347 = vst [vmem:[%s337 + $0x58] sm:$0xff] %v2309
        %2348 = vst [vmem:[%s337 + $0x60] sm:$0xff] %v2214
        %2349 = vst [vmem:[%s337 + $0x68] sm:$0xff] %v2312
        %2350 = vst [vmem:[%s337 + $0x70] sm:$0xff] %v2216
        %2351 = vst [vmem:[%s337 + $0x78] sm:$0xff] %v2314
        %2352 = vst [vmem:[%s337 + $0x80] sm:$0xff] %v2219
        %2353 = vst [vmem:[%s337 + $0x88] sm:$0xff] %v2317
        %2354 = vst [vmem:[%s337 + $0x90] sm:$0xff] %v2221
        %2355 = vst [vmem:[%s337 + $0x98] sm:$0xff] %v2319
        %2356 = vst [vmem:[%s337 + $0xa0] sm:$0xff] %v2224
        %2357 = vst [vmem:[%s337 + $0xa8] sm:$0xff] %v2322
        %2358 = vst [vmem:[%s337 + $0xb0] sm:$0xff] %v2226
        %2359 = vst [vmem:[%s337 + $0xb8] sm:$0xff] %v2324
        %2360 = vst [vmem:[%s337 + $0xc0] sm:$0xff] %v2229
        %2361 = vst [vmem:[%s337 + $0xc8] sm:$0xff] %v2327
        %2362 = vst [vmem:[%s337 + $0xd0] sm:$0xff] %v2231
        %2363 = vst [vmem:[%s337 + $0xd8] sm:$0xff] %v2329
        %2364 = vst [vmem:[%s337 + $0xe0] sm:$0xff] %v2234
        %2365 = vst [vmem:[%s337 + $0xe8] sm:$0xff] %v2332
        %2366 = vst [vmem:[%s337 + $0xf0] sm:$0xff] %v2236
        %2367 = vst [vmem:[%s337 + $0xf8] sm:$0xff] %v2334
        %s2368 = sand.u32 %s154, 1
        %s2369 = scalar_lea.sflag [#allocation4], %s2368
        %s2370 = sand.u32 %s154, 1
        %s2371 = smul.addr %s2370, 256
        %s2372 = scalar_lea.vmem [#allocation10], %s2371
        // Predicated region
        $region57: #{model_forward.1} parent=39 // pred_check
          %p2373 = pneg %p164
        $region58: #{model_forward.1} parent=39 // pred_check_branch
          %2375 = sbr.rel (%p2373) target = $region60
        $region59: #{model_forward.1} parent=39 // pred_region
          %s2376 = smul.u32 16, %s26
          %2378 = vsyncadd %s2369, 0
          %s2379 = smul.addr %s2376, 2
          %s2380 = smul.addr %s2379, 8
          %s2381 = scalar_lea.hbm %s5, %s2380
          %s2382 = sshll.u32 %s2372, 4
          %s2383 = int_to_ptr.vmem [resolvable:$true] %s2382
          %s2384 = sshll.u32 %s2381, 4
          %s2385 = int_to_ptr.hbm [resolvable:$true] %s2384
          %2390 = dma.vmem_to_hbm [thread:$0]  %s2383, 4096, %s2385, %s2369, 256, 256, 16
        $region60: #{model_forward.1} parent=39 // pred_fallthru
          _
      $region40: #{model_forward.1} parent=5 // pred_fallthru
        _
      %p2391 = scmp.le.s32.totalorder 2, %s21
      // Predicated region
      $region61: #{model_forward.1} parent=5 // pred_check
        %p2392 = pneg %p2391
      $region62: #{model_forward.1} parent=5 // pred_check_branch
        %2394 = sbr.rel (%p2392) target = $region64
      $region63: #{model_forward.1} parent=5 // pred_region
        %s2395 = ssub.s32 %s21, 2
        // Predicated region
        $region65: #{model_forward.1} parent=63 // pred_check
          %p2396 = pneg %p170
        $region66: #{model_forward.1} parent=63 // pred_check_branch
          %2398 = sbr.rel (%p2396) target = $region68
        $region67: #{model_forward.1} parent=63 // pred_region
          %s2399 = sand.u32 %s155, 1
          %s2400 = scalar_lea.sflag [#allocation4], %s2399
          %s2401 = sand.u32 %s155, 1
          %s2402 = smul.addr %s2401, 256
          %s2403 = scalar_lea.vmem [#allocation10], %s2402
          %2405 = dma.done %s2400, 4096
        $region68: #{model_forward.1} parent=63 // pred_fallthru
          _
      $region64: #{model_forward.1} parent=5 // pred_fallthru
        _
    $region6: #{model_forward.1} parent=1 // loop_footer
      %s25 = sadd.s32 1, %s21
    $region7: #{model_forward.1} parent=1 // loop_footer_branch
      %20 = sbr.rel target = $region3
    $region8: #{model_forward.1} parent=1 // loop_exit
      _
    %2406 = vsyncpa [#allocation3], 1
    %s2407 = scalar_lea.sflag [#allocation3], 1
    %2408 = vsyncpa %s2407, 1
    %2409 = vsyncpa [#allocation6], 1
    %s2410 = scalar_lea.sflag [#allocation6], 1
    %2411 = vsyncpa %s2410, 1
    %2412 = vsyncpa [#allocation9], 1
    %2413 = vsyncpa [#allocation4], 1
    %s2414 = scalar_lea.sflag [#allocation4], 1
    %2415 = vsyncpa %s2414, 1

</llo_original>
